<compile_context>
chip_gen: v7x
topology: tpu7x:2x2x1
jax: 0.10.0
libtpu: 0.0.40
codegen_flags: <defaults>
</compile_context>

<pallas_src>
import functools

import jax
import jax.numpy as jnp
from jax import lax
from jax.experimental import pallas as pl
from jax.experimental.pallas import tpu as pltpu


def _distillation_kernel(x_ref, w_ref, b_ref, m_ref, o_ref, *, W, d):
    # x_ref : (C, L)        input, L = N*H*W on lanes, channels on sublanes
    # w_ref : (4, C, 9*C)   im2col-packed weights (zero rows/cols where padded)
    # b_ref : (4, C, 1)     biases (conv4 rows >= d are zero)
    # m_ref : (9, C, L)     per-tap zero-padding masks (f32 0/1), pre-broadcast
    # o_ref : (4*d, L)      output block
    x = x_ref[...]
    C, L = x.shape

    # Static tap offsets, row-major over the 3x3 window (matches weight pack).
    offsets = [oy * W + ox for oy in (-1, 0, 1) for ox in (-1, 0, 1)]

    def im2col(a):
        # a: (C, L) -> (9*C, L); rows t*C + c = channel c shifted by tap t,
        # zeroed outside the image via the precomputed mask (== zero padding).
        cols = []
        for t, off in enumerate(offsets):
            if off == 0:
                cols.append(a)                         # center tap: no roll/mask
            else:
                shifted = pltpu.roll(a, (-off) % L, 1)  # shifted[i] = a[i + off]
                cols.append(shifted * m_ref[t])
        return jnp.concatenate(cols, axis=0)

    def conv3x3(a, i, lrelu):
        # One MXU matmul: (C, 9C) @ (9C, L) -> (C, L), lane-dense.
        acc = jnp.dot(w_ref[i], im2col(a), preferred_element_type=jnp.float32)
        acc = acc + b_ref[i]
        if lrelu:
            acc = jnp.where(acc >= 0, acc, 0.05 * acc)   # LeakyReLU(0.05)
        return acc

    c1 = conv3x3(x, 0, True)
    c2 = conv3x3(c1, 1, True)     # zero weight rows over distilled input chans
    c3 = conv3x3(c2, 2, True)
    c4 = conv3x3(c3, 3, False)    # rows >= d are zero-weight/bias junk

    # out = cat([dc1, dc2, dc3, c4], channel axis) -> ONE dense store.
    out = jnp.concatenate([c1[:d], c2[:d], c3[:d], c4[:d]], axis=0)
    o_ref[...] = out.astype(o_ref.dtype)


def _pack_weight(w_hwio, cin_full, cin_offset, cout_full):
    """(3,3,Cin,Cout) HWIO -> (cout_full, 9*cin_full).

    Zero rows outside the [cin_offset, cin_offset+Cin) input-channel window and
    zero output rows beyond Cout.  Column order matches the kernel's im2col
    stacking: index = (dy*3 + dx)*cin_full + c."""
    kh, kw, cin, cout = w_hwio.shape
    if cin != cin_full:
        w_full = jnp.zeros((kh, kw, cin_full, cout), w_hwio.dtype)
        w_hwio = w_full.at[:, :, cin_offset:cin_offset + cin, :].set(w_hwio)
    w = jnp.transpose(w_hwio, (3, 0, 1, 2)).reshape(cout, kh * kw * cin_full)
    if cout != cout_full:
        w = jnp.zeros((cout_full, kh * kw * cin_full), w.dtype).at[:cout].set(w)
    return w


def _build_masks(H, W, n_images, C, dtype=jnp.float32):
    """(9, C, n_images*H*W) f32 0/1 masks reproducing 'same' zero padding."""
    hh = jnp.arange(H)[:, None]
    ww = jnp.arange(W)[None, :]
    masks = []
    for oy in (-1, 0, 1):
        for ox in (-1, 0, 1):
            m = ((hh + oy >= 0) & (hh + oy < H)
                 & (ww + ox >= 0) & (ww + ox < W)).astype(dtype)      # (H, W)
            m = jnp.tile(m.reshape(1, H * W), (1, n_images))          # (1, L)
            masks.append(jnp.broadcast_to(m, (C, n_images * H * W)))  # (C, L)
    return jnp.stack(masks, axis=0)                                   # (9, C, L)


@functools.partial(jax.jit, static_argnames=("distilled", "remaining"))
def distillation_forward(x_nchw, params, distilled, remaining):
    """Matches PyTorch Distillation.forward; input/output are NCHW."""
    del remaining  # implied by params / distilled
    N, C, H, W = x_nchw.shape
    d = distilled
    HW = H * W
    L = N * HW
    c_out = 4 * d

    # Layout requirements of this kernel (see review correctness notes).
    assert C % 8 == 0, "channels must be a multiple of 8 (sublane alignment)"
    assert L % 128 == 0, "N*H*W must be a multiple of 128 (lane alignment)"
    assert c_out % 8 == 0, "4*distilled must be a multiple of 8"
    assert W >= 2, "roll-then-mask trick requires W >= 2"

    # Stacked, zero-padded weights / biases (one operand each).
    w_stack = jnp.stack([
        _pack_weight(params["w1"], C, 0, C),
        _pack_weight(params["w2"], C, d, C),
        _pack_weight(params["w3"], C, d, C),
        _pack_weight(params["w4"], C, d, C),
    ], axis=0)                                                  # (4, C, 9C)
    b4_full = jnp.zeros((C,), params["b4"].dtype).at[:d].set(params["b4"])
    b_stack = jnp.stack([params["b1"], params["b2"], params["b3"], b4_full],
                        axis=0).reshape(4, C, 1)                # (4, C, 1)

    masks = _build_masks(H, W, N, C, x_nchw.dtype)              # (9, C, L)

    # Fold batch onto the lane axis: (N, C, HW) -> (C, N*HW).
    x_folded = jnp.transpose(x_nchw.reshape(N, C, HW), (1, 0, 2)).reshape(C, L)

    kernel = functools.partial(_distillation_kernel, W=W, d=d)

    out_flat = pl.pallas_call(
        kernel,
        out_shape=jax.ShapeDtypeStruct((c_out, L), x_nchw.dtype),
        grid=(1,),
        in_specs=[
            pl.BlockSpec((C, L), lambda g: (0, g)),
            pl.BlockSpec((4, C, 9 * C), lambda g: (0, 0, 0)),
            pl.BlockSpec((4, C, 1), lambda g: (0, 0, 0)),
            pl.BlockSpec((9, C, L), lambda g: (0, 0, 0)),
        ],
        out_specs=pl.BlockSpec((c_out, L), lambda g: (0, g)),
        compiler_params=pltpu.CompilerParams(
            dimension_semantics=("arbitrary",)),
    )(x_folded, w_stack, b_stack, masks)

    # (4d, N*HW) -> (N, 4d, H, W)
    return jnp.transpose(out_flat.reshape(c_out, N, H, W), (1, 0, 2, 3))


def init_distillation_params(key, in_channels, rate=0.25):
    """Deterministic PyTorch-default-style (uniform) init; HWIO weight layout."""
    distilled = int(in_channels * rate)
    remaining = in_channels - distilled

    def conv_init(k, cin, cout):
        kw, kb = jax.random.split(k)
        bound = 1.0 / jnp.sqrt(cin * 3.0 * 3.0)
        w = jax.random.uniform(kw, (3, 3, cin, cout), jnp.float32,
                               minval=-bound, maxval=bound)
        b = jax.random.uniform(kb, (cout,), jnp.float32,
                               minval=-bound, maxval=bound)
        return w, b

    k1, k2, k3, k4 = jax.random.split(key, 4)
    w1, b1 = conv_init(k1, in_channels, in_channels)
    w2, b2 = conv_init(k2, remaining, in_channels)
    w3, b3 = conv_init(k3, remaining, in_channels)
    w4, b4 = conv_init(k4, remaining, distilled)
    params = dict(w1=w1, b1=b1, w2=w2, b2=b2, w3=w3, b3=b3, w4=w4, b4=b4)
    return params, distilled, remaining


# ----------------------------- reference (pure JAX) -----------------------------
def _ref_conv(x_nhwc, w_hwio, b, lrelu):
    y = lax.conv_general_dilated(
        x_nhwc, w_hwio, window_strides=(1, 1), padding="SAME",
        dimension_numbers=("NHWC", "HWIO", "NHWC"))
    y = y + b[None, None, None, :]
    if lrelu:
        y = jnp.where(y >= 0, y, 0.05 * y)
    return y


def _ref_forward(x_nchw, p, d):
    x = jnp.transpose(x_nchw, (0, 2, 3, 1))
    c1 = _ref_conv(x, p["w1"], p["b1"], True)
    dc1, rc1 = c1[..., :d], c1[..., d:]
    c2 = _ref_conv(rc1, p["w2"], p["b2"], True)
    dc2, rc2 = c2[..., :d], c2[..., d:]
    c3 = _ref_conv(rc2, p["w3"], p["b3"], True)
    dc3, rc3 = c3[..., :d], c3[..., d:]
    c4 = _ref_conv(rc3, p["w4"], p["b4"], False)
    out = jnp.concatenate([dc1, dc2, dc3, c4], axis=-1)
    return jnp.transpose(out, (0, 3, 1, 2))


if __name__ == "__main__":
    key = jax.random.PRNGKey(0)
    k_param, k_x = jax.random.split(key)

    batch, in_channels, H, W = 2, 8, 16, 16   # distilled=2, remaining=6
    params, distilled, remaining = init_distillation_params(k_param, in_channels)

    x = jax.random.normal(k_x, (batch, in_channels, H, W), jnp.float32)

    out = distillation_forward(x, params, distilled, remaining)
    out = jax.block_until_ready(out)

    ref = _ref_forward(x, params, distilled)
    assert out.shape == ref.shape, (out.shape, ref.shape)
    assert jnp.allclose(out, ref, atol=1e-4, rtol=1e-4), "mismatch vs reference"

    print("KERNEL_OK")
</pallas_src>

<mosaic_0001>
module attributes {stable_mosaic.version = 11 : i64} {
  func.func @_distillation_kernel(%arg0: i32, %arg1: memref<8x512xf32, #tpu.memory_space<vmem>>, %arg2: memref<4x8x72xf32, #tpu.memory_space<vmem>>, %arg3: memref<4x8x1xf32, #tpu.memory_space<vmem>>, %arg4: memref<9x8x512xf32, #tpu.memory_space<vmem>>, %arg5: memref<8x512xf32, #tpu.memory_space<vmem>>) attributes {dimension_semantics = [#tpu.dimension_semantics<arbitrary>], iteration_bounds = array<i64: 1>, scalar_prefetch = 0 : i64, scratch_operands = 0 : i64, tpu.core_type = #tpu.core_type<tc>, window_params = [{transform_indices = @transform_0, window_bounds = array<i64: 8, 512>}, {pipeline_mode = #tpu.pipeline_mode<synchronous>, transform_indices = @transform_1, window_bounds = array<i64: 4, 8, 72>}, {pipeline_mode = #tpu.pipeline_mode<synchronous>, transform_indices = @transform_2, window_bounds = array<i64: 4, 8, 1>}, {pipeline_mode = #tpu.pipeline_mode<synchronous>, transform_indices = @transform_3, window_bounds = array<i64: 9, 8, 512>}, {transform_indices = @transform_4, window_bounds = array<i64: 8, 512>}]} {
    %c0 = arith.constant 0 : index
    %c0_0 = arith.constant 0 : index
    %0 = vector.load %arg1[%c0, %c0_0] : memref<8x512xf32, #tpu.memory_space<vmem>>, vector<8x512xf32>
    %c0_1 = arith.constant 0 : index
    %c0_2 = arith.constant 0 : index
    %c0_3 = arith.constant 0 : index
    %1 = vector.load %arg2[%c0_1, %c0_2, %c0_3] : memref<4x8x72xf32, #tpu.memory_space<vmem>>, vector<1x8x72xf32>
    %2 = vector.shape_cast %1 : vector<1x8x72xf32> to vector<8x72xf32>
    %c17_i32 = arith.constant 17 : i32
    %3 = tpu.dynamic_rotate %0 by %c17_i32 dim 1 : vector<8x512xf32>, i32 -> vector<8x512xf32>
    %c0_4 = arith.constant 0 : index
    %c0_5 = arith.constant 0 : index
    %c0_6 = arith.constant 0 : index
    %4 = vector.load %arg4[%c0_4, %c0_5, %c0_6] : memref<9x8x512xf32, #tpu.memory_space<vmem>>, vector<1x8x512xf32>
    %5 = vector.shape_cast %4 : vector<1x8x512xf32> to vector<8x512xf32>
    %6 = arith.mulf %3, %5 : vector<8x512xf32>
    %c16_i32 = arith.constant 16 : i32
    %7 = tpu.dynamic_rotate %0 by %c16_i32 dim 1 : vector<8x512xf32>, i32 -> vector<8x512xf32>
    %c1 = arith.constant 1 : index
    %c0_7 = arith.constant 0 : index
    %c0_8 = arith.constant 0 : index
    %8 = vector.load %arg4[%c1, %c0_7, %c0_8] : memref<9x8x512xf32, #tpu.memory_space<vmem>>, vector<1x8x512xf32>
    %9 = vector.shape_cast %8 : vector<1x8x512xf32> to vector<8x512xf32>
    %10 = arith.mulf %7, %9 : vector<8x512xf32>
    %c15_i32 = arith.constant 15 : i32
    %11 = tpu.dynamic_rotate %0 by %c15_i32 dim 1 : vector<8x512xf32>, i32 -> vector<8x512xf32>
    %c2 = arith.constant 2 : index
    %c0_9 = arith.constant 0 : index
    %c0_10 = arith.constant 0 : index
    %12 = vector.load %arg4[%c2, %c0_9, %c0_10] : memref<9x8x512xf32, #tpu.memory_space<vmem>>, vector<1x8x512xf32>
    %13 = vector.shape_cast %12 : vector<1x8x512xf32> to vector<8x512xf32>
    %14 = arith.mulf %11, %13 : vector<8x512xf32>
    %c1_i32 = arith.constant 1 : i32
    %15 = tpu.dynamic_rotate %0 by %c1_i32 dim 1 : vector<8x512xf32>, i32 -> vector<8x512xf32>
    %c3 = arith.constant 3 : index
    %c0_11 = arith.constant 0 : index
    %c0_12 = arith.constant 0 : index
    %16 = vector.load %arg4[%c3, %c0_11, %c0_12] : memref<9x8x512xf32, #tpu.memory_space<vmem>>, vector<1x8x512xf32>
    %17 = vector.shape_cast %16 : vector<1x8x512xf32> to vector<8x512xf32>
    %18 = arith.mulf %15, %17 : vector<8x512xf32>
    %c511_i32 = arith.constant 511 : i32
    %19 = tpu.dynamic_rotate %0 by %c511_i32 dim 1 : vector<8x512xf32>, i32 -> vector<8x512xf32>
    %c5 = arith.constant 5 : index
    %c0_13 = arith.constant 0 : index
    %c0_14 = arith.constant 0 : index
    %20 = vector.load %arg4[%c5, %c0_13, %c0_14] : memref<9x8x512xf32, #tpu.memory_space<vmem>>, vector<1x8x512xf32>
    %21 = vector.shape_cast %20 : vector<1x8x512xf32> to vector<8x512xf32>
    %22 = arith.mulf %19, %21 : vector<8x512xf32>
    %c497_i32 = arith.constant 497 : i32
    %23 = tpu.dynamic_rotate %0 by %c497_i32 dim 1 : vector<8x512xf32>, i32 -> vector<8x512xf32>
    %c6 = arith.constant 6 : index
    %c0_15 = arith.constant 0 : index
    %c0_16 = arith.constant 0 : index
    %24 = vector.load %arg4[%c6, %c0_15, %c0_16] : memref<9x8x512xf32, #tpu.memory_space<vmem>>, vector<1x8x512xf32>
    %25 = vector.shape_cast %24 : vector<1x8x512xf32> to vector<8x512xf32>
    %26 = arith.mulf %23, %25 : vector<8x512xf32>
    %c496_i32 = arith.constant 496 : i32
    %27 = tpu.dynamic_rotate %0 by %c496_i32 dim 1 : vector<8x512xf32>, i32 -> vector<8x512xf32>
    %c7 = arith.constant 7 : index
    %c0_17 = arith.constant 0 : index
    %c0_18 = arith.constant 0 : index
    %28 = vector.load %arg4[%c7, %c0_17, %c0_18] : memref<9x8x512xf32, #tpu.memory_space<vmem>>, vector<1x8x512xf32>
    %29 = vector.shape_cast %28 : vector<1x8x512xf32> to vector<8x512xf32>
    %30 = arith.mulf %27, %29 : vector<8x512xf32>
    %c495_i32 = arith.constant 495 : i32
    %31 = tpu.dynamic_rotate %0 by %c495_i32 dim 1 : vector<8x512xf32>, i32 -> vector<8x512xf32>
    %c8 = arith.constant 8 : index
    %c0_19 = arith.constant 0 : index
    %c0_20 = arith.constant 0 : index
    %32 = vector.load %arg4[%c8, %c0_19, %c0_20] : memref<9x8x512xf32, #tpu.memory_space<vmem>>, vector<1x8x512xf32>
    %33 = vector.shape_cast %32 : vector<1x8x512xf32> to vector<8x512xf32>
    %34 = arith.mulf %31, %33 : vector<8x512xf32>
    %35 = tpu.concatenate %6, %10, %14, %18, %0, %22, %26, %30, %34 in 0 : vector<8x512xf32>, vector<8x512xf32>, vector<8x512xf32>, vector<8x512xf32>, vector<8x512xf32>, vector<8x512xf32>, vector<8x512xf32>, vector<8x512xf32>, vector<8x512xf32> -> vector<72x512xf32>
    %cst = arith.constant dense<0.000000e+00> : vector<8x512xf32>
    %36 = tpu.matmul %2, %35, %cst {dimension_numbers = #tpu.dot_dimension_numbers<[1], [0], [0], [1], [0, 0, 1, 1], [], []>} : vector<8x72xf32>, vector<72x512xf32>, vector<8x512xf32> -> vector<8x512xf32>
    %c0_21 = arith.constant 0 : index
    %c0_22 = arith.constant 0 : index
    %c0_23 = arith.constant 0 : index
    %37 = vector.load %arg3[%c0_21, %c0_22, %c0_23] : memref<4x8x1xf32, #tpu.memory_space<vmem>>, vector<1x8x1xf32>
    %38 = vector.shape_cast %37 : vector<1x8x1xf32> to vector<8x1xf32>
    %39 = vector.broadcast %38 : vector<8x1xf32> to vector<8x512xf32>
    %40 = arith.addf %36, %39 : vector<8x512xf32>
    %cst_24 = arith.constant 0.000000e+00 : f32
    %41 = vector.broadcast %cst_24 : f32 to vector<8x512xf32>
    %42 = arith.cmpf oge, %40, %41 : vector<8x512xf32>
    %cst_25 = arith.constant 5.000000e-02 : f32
    %43 = vector.broadcast %cst_25 : f32 to vector<8x512xf32>
    %44 = arith.mulf %43, %40 : vector<8x512xf32>
    %45 = arith.select %42, %40, %44 : vector<8x512xi1>, vector<8x512xf32>
    %c1_26 = arith.constant 1 : index
    %c0_27 = arith.constant 0 : index
    %c0_28 = arith.constant 0 : index
    %46 = vector.load %arg2[%c1_26, %c0_27, %c0_28] : memref<4x8x72xf32, #tpu.memory_space<vmem>>, vector<1x8x72xf32>
    %47 = vector.shape_cast %46 : vector<1x8x72xf32> to vector<8x72xf32>
    %c17_i32_29 = arith.constant 17 : i32
    %48 = tpu.dynamic_rotate %45 by %c17_i32_29 dim 1 : vector<8x512xf32>, i32 -> vector<8x512xf32>
    %c0_30 = arith.constant 0 : index
    %c0_31 = arith.constant 0 : index
    %c0_32 = arith.constant 0 : index
    %49 = vector.load %arg4[%c0_30, %c0_31, %c0_32] : memref<9x8x512xf32, #tpu.memory_space<vmem>>, vector<1x8x512xf32>
    %50 = vector.shape_cast %49 : vector<1x8x512xf32> to vector<8x512xf32>
    %51 = arith.mulf %48, %50 : vector<8x512xf32>
    %c16_i32_33 = arith.constant 16 : i32
    %52 = tpu.dynamic_rotate %45 by %c16_i32_33 dim 1 : vector<8x512xf32>, i32 -> vector<8x512xf32>
    %c1_34 = arith.constant 1 : index
    %c0_35 = arith.constant 0 : index
    %c0_36 = arith.constant 0 : index
    %53 = vector.load %arg4[%c1_34, %c0_35, %c0_36] : memref<9x8x512xf32, #tpu.memory_space<vmem>>, vector<1x8x512xf32>
    %54 = vector.shape_cast %53 : vector<1x8x512xf32> to vector<8x512xf32>
    %55 = arith.mulf %52, %54 : vector<8x512xf32>
    %c15_i32_37 = arith.constant 15 : i32
    %56 = tpu.dynamic_rotate %45 by %c15_i32_37 dim 1 : vector<8x512xf32>, i32 -> vector<8x512xf32>
    %c2_38 = arith.constant 2 : index
    %c0_39 = arith.constant 0 : index
    %c0_40 = arith.constant 0 : index
    %57 = vector.load %arg4[%c2_38, %c0_39, %c0_40] : memref<9x8x512xf32, #tpu.memory_space<vmem>>, vector<1x8x512xf32>
    %58 = vector.shape_cast %57 : vector<1x8x512xf32> to vector<8x512xf32>
    %59 = arith.mulf %56, %58 : vector<8x512xf32>
    %c1_i32_41 = arith.constant 1 : i32
    %60 = tpu.dynamic_rotate %45 by %c1_i32_41 dim 1 : vector<8x512xf32>, i32 -> vector<8x512xf32>
    %c3_42 = arith.constant 3 : index
    %c0_43 = arith.constant 0 : index
    %c0_44 = arith.constant 0 : index
    %61 = vector.load %arg4[%c3_42, %c0_43, %c0_44] : memref<9x8x512xf32, #tpu.memory_space<vmem>>, vector<1x8x512xf32>
    %62 = vector.shape_cast %61 : vector<1x8x512xf32> to vector<8x512xf32>
    %63 = arith.mulf %60, %62 : vector<8x512xf32>
    %c511_i32_45 = arith.constant 511 : i32
    %64 = tpu.dynamic_rotate %45 by %c511_i32_45 dim 1 : vector<8x512xf32>, i32 -> vector<8x512xf32>
    %c5_46 = arith.constant 5 : index
    %c0_47 = arith.constant 0 : index
    %c0_48 = arith.constant 0 : index
    %65 = vector.load %arg4[%c5_46, %c0_47, %c0_48] : memref<9x8x512xf32, #tpu.memory_space<vmem>>, vector<1x8x512xf32>
    %66 = vector.shape_cast %65 : vector<1x8x512xf32> to vector<8x512xf32>
    %67 = arith.mulf %64, %66 : vector<8x512xf32>
    %c497_i32_49 = arith.constant 497 : i32
    %68 = tpu.dynamic_rotate %45 by %c497_i32_49 dim 1 : vector<8x512xf32>, i32 -> vector<8x512xf32>
    %c6_50 = arith.constant 6 : index
    %c0_51 = arith.constant 0 : index
    %c0_52 = arith.constant 0 : index
    %69 = vector.load %arg4[%c6_50, %c0_51, %c0_52] : memref<9x8x512xf32, #tpu.memory_space<vmem>>, vector<1x8x512xf32>
    %70 = vector.shape_cast %69 : vector<1x8x512xf32> to vector<8x512xf32>
    %71 = arith.mulf %68, %70 : vector<8x512xf32>
    %c496_i32_53 = arith.constant 496 : i32
    %72 = tpu.dynamic_rotate %45 by %c496_i32_53 dim 1 : vector<8x512xf32>, i32 -> vector<8x512xf32>
    %c7_54 = arith.constant 7 : index
    %c0_55 = arith.constant 0 : index
    %c0_56 = arith.constant 0 : index
    %73 = vector.load %arg4[%c7_54, %c0_55, %c0_56] : memref<9x8x512xf32, #tpu.memory_space<vmem>>, vector<1x8x512xf32>
    %74 = vector.shape_cast %73 : vector<1x8x512xf32> to vector<8x512xf32>
    %75 = arith.mulf %72, %74 : vector<8x512xf32>
    %c495_i32_57 = arith.constant 495 : i32
    %76 = tpu.dynamic_rotate %45 by %c495_i32_57 dim 1 : vector<8x512xf32>, i32 -> vector<8x512xf32>
    %c8_58 = arith.constant 8 : index
    %c0_59 = arith.constant 0 : index
    %c0_60 = arith.constant 0 : index
    %77 = vector.load %arg4[%c8_58, %c0_59, %c0_60] : memref<9x8x512xf32, #tpu.memory_space<vmem>>, vector<1x8x512xf32>
    %78 = vector.shape_cast %77 : vector<1x8x512xf32> to vector<8x512xf32>
    %79 = arith.mulf %76, %78 : vector<8x512xf32>
    %80 = tpu.concatenate %51, %55, %59, %63, %45, %67, %71, %75, %79 in 0 : vector<8x512xf32>, vector<8x512xf32>, vector<8x512xf32>, vector<8x512xf32>, vector<8x512xf32>, vector<8x512xf32>, vector<8x512xf32>, vector<8x512xf32>, vector<8x512xf32> -> vector<72x512xf32>
    %cst_61 = arith.constant dense<0.000000e+00> : vector<8x512xf32>
    %81 = tpu.matmul %47, %80, %cst_61 {dimension_numbers = #tpu.dot_dimension_numbers<[1], [0], [0], [1], [0, 0, 1, 1], [], []>} : vector<8x72xf32>, vector<72x512xf32>, vector<8x512xf32> -> vector<8x512xf32>
    %c1_62 = arith.constant 1 : index
    %c0_63 = arith.constant 0 : index
    %c0_64 = arith.constant 0 : index
    %82 = vector.load %arg3[%c1_62, %c0_63, %c0_64] : memref<4x8x1xf32, #tpu.memory_space<vmem>>, vector<1x8x1xf32>
    %83 = vector.shape_cast %82 : vector<1x8x1xf32> to vector<8x1xf32>
    %84 = vector.broadcast %83 : vector<8x1xf32> to vector<8x512xf32>
    %85 = arith.addf %81, %84 : vector<8x512xf32>
    %cst_65 = arith.constant 0.000000e+00 : f32
    %86 = vector.broadcast %cst_65 : f32 to vector<8x512xf32>
    %87 = arith.cmpf oge, %85, %86 : vector<8x512xf32>
    %cst_66 = arith.constant 5.000000e-02 : f32
    %88 = vector.broadcast %cst_66 : f32 to vector<8x512xf32>
    %89 = arith.mulf %88, %85 : vector<8x512xf32>
    %90 = arith.select %87, %85, %89 : vector<8x512xi1>, vector<8x512xf32>
    %c2_67 = arith.constant 2 : index
    %c0_68 = arith.constant 0 : index
    %c0_69 = arith.constant 0 : index
    %91 = vector.load %arg2[%c2_67, %c0_68, %c0_69] : memref<4x8x72xf32, #tpu.memory_space<vmem>>, vector<1x8x72xf32>
    %92 = vector.shape_cast %91 : vector<1x8x72xf32> to vector<8x72xf32>
    %c17_i32_70 = arith.constant 17 : i32
    %93 = tpu.dynamic_rotate %90 by %c17_i32_70 dim 1 : vector<8x512xf32>, i32 -> vector<8x512xf32>
    %c0_71 = arith.constant 0 : index
    %c0_72 = arith.constant 0 : index
    %c0_73 = arith.constant 0 : index
    %94 = vector.load %arg4[%c0_71, %c0_72, %c0_73] : memref<9x8x512xf32, #tpu.memory_space<vmem>>, vector<1x8x512xf32>
    %95 = vector.shape_cast %94 : vector<1x8x512xf32> to vector<8x512xf32>
    %96 = arith.mulf %93, %95 : vector<8x512xf32>
    %c16_i32_74 = arith.constant 16 : i32
    %97 = tpu.dynamic_rotate %90 by %c16_i32_74 dim 1 : vector<8x512xf32>, i32 -> vector<8x512xf32>
    %c1_75 = arith.constant 1 : index
    %c0_76 = arith.constant 0 : index
    %c0_77 = arith.constant 0 : index
    %98 = vector.load %arg4[%c1_75, %c0_76, %c0_77] : memref<9x8x512xf32, #tpu.memory_space<vmem>>, vector<1x8x512xf32>
    %99 = vector.shape_cast %98 : vector<1x8x512xf32> to vector<8x512xf32>
    %100 = arith.mulf %97, %99 : vector<8x512xf32>
    %c15_i32_78 = arith.constant 15 : i32
    %101 = tpu.dynamic_rotate %90 by %c15_i32_78 dim 1 : vector<8x512xf32>, i32 -> vector<8x512xf32>
    %c2_79 = arith.constant 2 : index
    %c0_80 = arith.constant 0 : index
    %c0_81 = arith.constant 0 : index
    %102 = vector.load %arg4[%c2_79, %c0_80, %c0_81] : memref<9x8x512xf32, #tpu.memory_space<vmem>>, vector<1x8x512xf32>
    %103 = vector.shape_cast %102 : vector<1x8x512xf32> to vector<8x512xf32>
    %104 = arith.mulf %101, %103 : vector<8x512xf32>
    %c1_i32_82 = arith.constant 1 : i32
    %105 = tpu.dynamic_rotate %90 by %c1_i32_82 dim 1 : vector<8x512xf32>, i32 -> vector<8x512xf32>
    %c3_83 = arith.constant 3 : index
    %c0_84 = arith.constant 0 : index
    %c0_85 = arith.constant 0 : index
    %106 = vector.load %arg4[%c3_83, %c0_84, %c0_85] : memref<9x8x512xf32, #tpu.memory_space<vmem>>, vector<1x8x512xf32>
    %107 = vector.shape_cast %106 : vector<1x8x512xf32> to vector<8x512xf32>
    %108 = arith.mulf %105, %107 : vector<8x512xf32>
    %c511_i32_86 = arith.constant 511 : i32
    %109 = tpu.dynamic_rotate %90 by %c511_i32_86 dim 1 : vector<8x512xf32>, i32 -> vector<8x512xf32>
    %c5_87 = arith.constant 5 : index
    %c0_88 = arith.constant 0 : index
    %c0_89 = arith.constant 0 : index
    %110 = vector.load %arg4[%c5_87, %c0_88, %c0_89] : memref<9x8x512xf32, #tpu.memory_space<vmem>>, vector<1x8x512xf32>
    %111 = vector.shape_cast %110 : vector<1x8x512xf32> to vector<8x512xf32>
    %112 = arith.mulf %109, %111 : vector<8x512xf32>
    %c497_i32_90 = arith.constant 497 : i32
    %113 = tpu.dynamic_rotate %90 by %c497_i32_90 dim 1 : vector<8x512xf32>, i32 -> vector<8x512xf32>
    %c6_91 = arith.constant 6 : index
    %c0_92 = arith.constant 0 : index
    %c0_93 = arith.constant 0 : index
    %114 = vector.load %arg4[%c6_91, %c0_92, %c0_93] : memref<9x8x512xf32, #tpu.memory_space<vmem>>, vector<1x8x512xf32>
    %115 = vector.shape_cast %114 : vector<1x8x512xf32> to vector<8x512xf32>
    %116 = arith.mulf %113, %115 : vector<8x512xf32>
    %c496_i32_94 = arith.constant 496 : i32
    %117 = tpu.dynamic_rotate %90 by %c496_i32_94 dim 1 : vector<8x512xf32>, i32 -> vector<8x512xf32>
    %c7_95 = arith.constant 7 : index
    %c0_96 = arith.constant 0 : index
    %c0_97 = arith.constant 0 : index
    %118 = vector.load %arg4[%c7_95, %c0_96, %c0_97] : memref<9x8x512xf32, #tpu.memory_space<vmem>>, vector<1x8x512xf32>
    %119 = vector.shape_cast %118 : vector<1x8x512xf32> to vector<8x512xf32>
    %120 = arith.mulf %117, %119 : vector<8x512xf32>
    %c495_i32_98 = arith.constant 495 : i32
    %121 = tpu.dynamic_rotate %90 by %c495_i32_98 dim 1 : vector<8x512xf32>, i32 -> vector<8x512xf32>
    %c8_99 = arith.constant 8 : index
    %c0_100 = arith.constant 0 : index
    %c0_101 = arith.constant 0 : index
    %122 = vector.load %arg4[%c8_99, %c0_100, %c0_101] : memref<9x8x512xf32, #tpu.memory_space<vmem>>, vector<1x8x512xf32>
    %123 = vector.shape_cast %122 : vector<1x8x512xf32> to vector<8x512xf32>
    %124 = arith.mulf %121, %123 : vector<8x512xf32>
    %125 = tpu.concatenate %96, %100, %104, %108, %90, %112, %116, %120, %124 in 0 : vector<8x512xf32>, vector<8x512xf32>, vector<8x512xf32>, vector<8x512xf32>, vector<8x512xf32>, vector<8x512xf32>, vector<8x512xf32>, vector<8x512xf32>, vector<8x512xf32> -> vector<72x512xf32>
    %cst_102 = arith.constant dense<0.000000e+00> : vector<8x512xf32>
    %126 = tpu.matmul %92, %125, %cst_102 {dimension_numbers = #tpu.dot_dimension_numbers<[1], [0], [0], [1], [0, 0, 1, 1], [], []>} : vector<8x72xf32>, vector<72x512xf32>, vector<8x512xf32> -> vector<8x512xf32>
    %c2_103 = arith.constant 2 : index
    %c0_104 = arith.constant 0 : index
    %c0_105 = arith.constant 0 : index
    %127 = vector.load %arg3[%c2_103, %c0_104, %c0_105] : memref<4x8x1xf32, #tpu.memory_space<vmem>>, vector<1x8x1xf32>
    %128 = vector.shape_cast %127 : vector<1x8x1xf32> to vector<8x1xf32>
    %129 = vector.broadcast %128 : vector<8x1xf32> to vector<8x512xf32>
    %130 = arith.addf %126, %129 : vector<8x512xf32>
    %cst_106 = arith.constant 0.000000e+00 : f32
    %131 = vector.broadcast %cst_106 : f32 to vector<8x512xf32>
    %132 = arith.cmpf oge, %130, %131 : vector<8x512xf32>
    %cst_107 = arith.constant 5.000000e-02 : f32
    %133 = vector.broadcast %cst_107 : f32 to vector<8x512xf32>
    %134 = arith.mulf %133, %130 : vector<8x512xf32>
    %135 = arith.select %132, %130, %134 : vector<8x512xi1>, vector<8x512xf32>
    %c3_108 = arith.constant 3 : index
    %c0_109 = arith.constant 0 : index
    %c0_110 = arith.constant 0 : index
    %136 = vector.load %arg2[%c3_108, %c0_109, %c0_110] : memref<4x8x72xf32, #tpu.memory_space<vmem>>, vector<1x8x72xf32>
    %137 = vector.shape_cast %136 : vector<1x8x72xf32> to vector<8x72xf32>
    %c17_i32_111 = arith.constant 17 : i32
    %138 = tpu.dynamic_rotate %135 by %c17_i32_111 dim 1 : vector<8x512xf32>, i32 -> vector<8x512xf32>
    %c0_112 = arith.constant 0 : index
    %c0_113 = arith.constant 0 : index
    %c0_114 = arith.constant 0 : index
    %139 = vector.load %arg4[%c0_112, %c0_113, %c0_114] : memref<9x8x512xf32, #tpu.memory_space<vmem>>, vector<1x8x512xf32>
    %140 = vector.shape_cast %139 : vector<1x8x512xf32> to vector<8x512xf32>
    %141 = arith.mulf %138, %140 : vector<8x512xf32>
    %c16_i32_115 = arith.constant 16 : i32
    %142 = tpu.dynamic_rotate %135 by %c16_i32_115 dim 1 : vector<8x512xf32>, i32 -> vector<8x512xf32>
    %c1_116 = arith.constant 1 : index
    %c0_117 = arith.constant 0 : index
    %c0_118 = arith.constant 0 : index
    %143 = vector.load %arg4[%c1_116, %c0_117, %c0_118] : memref<9x8x512xf32, #tpu.memory_space<vmem>>, vector<1x8x512xf32>
    %144 = vector.shape_cast %143 : vector<1x8x512xf32> to vector<8x512xf32>
    %145 = arith.mulf %142, %144 : vector<8x512xf32>
    %c15_i32_119 = arith.constant 15 : i32
    %146 = tpu.dynamic_rotate %135 by %c15_i32_119 dim 1 : vector<8x512xf32>, i32 -> vector<8x512xf32>
    %c2_120 = arith.constant 2 : index
    %c0_121 = arith.constant 0 : index
    %c0_122 = arith.constant 0 : index
    %147 = vector.load %arg4[%c2_120, %c0_121, %c0_122] : memref<9x8x512xf32, #tpu.memory_space<vmem>>, vector<1x8x512xf32>
    %148 = vector.shape_cast %147 : vector<1x8x512xf32> to vector<8x512xf32>
    %149 = arith.mulf %146, %148 : vector<8x512xf32>
    %c1_i32_123 = arith.constant 1 : i32
    %150 = tpu.dynamic_rotate %135 by %c1_i32_123 dim 1 : vector<8x512xf32>, i32 -> vector<8x512xf32>
    %c3_124 = arith.constant 3 : index
    %c0_125 = arith.constant 0 : index
    %c0_126 = arith.constant 0 : index
    %151 = vector.load %arg4[%c3_124, %c0_125, %c0_126] : memref<9x8x512xf32, #tpu.memory_space<vmem>>, vector<1x8x512xf32>
    %152 = vector.shape_cast %151 : vector<1x8x512xf32> to vector<8x512xf32>
    %153 = arith.mulf %150, %152 : vector<8x512xf32>
    %c511_i32_127 = arith.constant 511 : i32
    %154 = tpu.dynamic_rotate %135 by %c511_i32_127 dim 1 : vector<8x512xf32>, i32 -> vector<8x512xf32>
    %c5_128 = arith.constant 5 : index
    %c0_129 = arith.constant 0 : index
    %c0_130 = arith.constant 0 : index
    %155 = vector.load %arg4[%c5_128, %c0_129, %c0_130] : memref<9x8x512xf32, #tpu.memory_space<vmem>>, vector<1x8x512xf32>
    %156 = vector.shape_cast %155 : vector<1x8x512xf32> to vector<8x512xf32>
    %157 = arith.mulf %154, %156 : vector<8x512xf32>
    %c497_i32_131 = arith.constant 497 : i32
    %158 = tpu.dynamic_rotate %135 by %c497_i32_131 dim 1 : vector<8x512xf32>, i32 -> vector<8x512xf32>
    %c6_132 = arith.constant 6 : index
    %c0_133 = arith.constant 0 : index
    %c0_134 = arith.constant 0 : index
    %159 = vector.load %arg4[%c6_132, %c0_133, %c0_134] : memref<9x8x512xf32, #tpu.memory_space<vmem>>, vector<1x8x512xf32>
    %160 = vector.shape_cast %159 : vector<1x8x512xf32> to vector<8x512xf32>
    %161 = arith.mulf %158, %160 : vector<8x512xf32>
    %c496_i32_135 = arith.constant 496 : i32
    %162 = tpu.dynamic_rotate %135 by %c496_i32_135 dim 1 : vector<8x512xf32>, i32 -> vector<8x512xf32>
    %c7_136 = arith.constant 7 : index
    %c0_137 = arith.constant 0 : index
    %c0_138 = arith.constant 0 : index
    %163 = vector.load %arg4[%c7_136, %c0_137, %c0_138] : memref<9x8x512xf32, #tpu.memory_space<vmem>>, vector<1x8x512xf32>
    %164 = vector.shape_cast %163 : vector<1x8x512xf32> to vector<8x512xf32>
    %165 = arith.mulf %162, %164 : vector<8x512xf32>
    %c495_i32_139 = arith.constant 495 : i32
    %166 = tpu.dynamic_rotate %135 by %c495_i32_139 dim 1 : vector<8x512xf32>, i32 -> vector<8x512xf32>
    %c8_140 = arith.constant 8 : index
    %c0_141 = arith.constant 0 : index
    %c0_142 = arith.constant 0 : index
    %167 = vector.load %arg4[%c8_140, %c0_141, %c0_142] : memref<9x8x512xf32, #tpu.memory_space<vmem>>, vector<1x8x512xf32>
    %168 = vector.shape_cast %167 : vector<1x8x512xf32> to vector<8x512xf32>
    %169 = arith.mulf %166, %168 : vector<8x512xf32>
    %170 = tpu.concatenate %141, %145, %149, %153, %135, %157, %161, %165, %169 in 0 : vector<8x512xf32>, vector<8x512xf32>, vector<8x512xf32>, vector<8x512xf32>, vector<8x512xf32>, vector<8x512xf32>, vector<8x512xf32>, vector<8x512xf32>, vector<8x512xf32> -> vector<72x512xf32>
    %cst_143 = arith.constant dense<0.000000e+00> : vector<8x512xf32>
    %171 = tpu.matmul %137, %170, %cst_143 {dimension_numbers = #tpu.dot_dimension_numbers<[1], [0], [0], [1], [0, 0, 1, 1], [], []>} : vector<8x72xf32>, vector<72x512xf32>, vector<8x512xf32> -> vector<8x512xf32>
    %c3_144 = arith.constant 3 : index
    %c0_145 = arith.constant 0 : index
    %c0_146 = arith.constant 0 : index
    %172 = vector.load %arg3[%c3_144, %c0_145, %c0_146] : memref<4x8x1xf32, #tpu.memory_space<vmem>>, vector<1x8x1xf32>
    %173 = vector.shape_cast %172 : vector<1x8x1xf32> to vector<8x1xf32>
    %174 = vector.broadcast %173 : vector<8x1xf32> to vector<8x512xf32>
    %175 = arith.addf %171, %174 : vector<8x512xf32>
    %176 = vector.extract_strided_slice %45 {offsets = [0, 0], sizes = [2, 512], strides = [1, 1]} : vector<8x512xf32> to vector<2x512xf32>
    %177 = vector.extract_strided_slice %90 {offsets = [0, 0], sizes = [2, 512], strides = [1, 1]} : vector<8x512xf32> to vector<2x512xf32>
    %178 = vector.extract_strided_slice %135 {offsets = [0, 0], sizes = [2, 512], strides = [1, 1]} : vector<8x512xf32> to vector<2x512xf32>
    %179 = vector.extract_strided_slice %175 {offsets = [0, 0], sizes = [2, 512], strides = [1, 1]} : vector<8x512xf32> to vector<2x512xf32>
    %180 = tpu.concatenate %176, %177, %178, %179 in 0 : vector<2x512xf32>, vector<2x512xf32>, vector<2x512xf32>, vector<2x512xf32> -> vector<8x512xf32>
    %c0_147 = arith.constant 0 : index
    %c0_148 = arith.constant 0 : index
    %181 = vector.load %arg5[%c0_147, %c0_148] : memref<8x512xf32, #tpu.memory_space<vmem>>, vector<8x512xf32>
    tpu.vector_store %arg5[%c0_147, %c0_148], %180 {strides = array<i32>} : memref<8x512xf32, #tpu.memory_space<vmem>>, vector<8x512xf32>,
    return
  }
  func.func @transform_0(%arg0: i32) -> (i32, i32) {
    %c0_i32 = arith.constant 0 : i32
    %c0_i32_0 = arith.constant 0 : i32
    return %c0_i32, %arg0 : i32, i32
  }
  func.func @transform_1(%arg0: i32) -> (i32, i32, i32) {
    %c0_i32 = arith.constant 0 : i32
    %c0_i32_0 = arith.constant 0 : i32
    %c0_i32_1 = arith.constant 0 : i32
    %c0_i32_2 = arith.constant 0 : i32
    return %c0_i32, %c0_i32_0, %c0_i32_1 : i32, i32, i32
  }
  func.func @transform_2(%arg0: i32) -> (i32, i32, i32) {
    %c0_i32 = arith.constant 0 : i32
    %c0_i32_0 = arith.constant 0 : i32
    %c0_i32_1 = arith.constant 0 : i32
    %c0_i32_2 = arith.constant 0 : i32
    return %c0_i32, %c0_i32_0, %c0_i32_1 : i32, i32, i32
  }
  func.func @transform_3(%arg0: i32) -> (i32, i32, i32) {
    %c0_i32 = arith.constant 0 : i32
    %c0_i32_0 = arith.constant 0 : i32
    %c0_i32_1 = arith.constant 0 : i32
    %c0_i32_2 = arith.constant 0 : i32
    return %c0_i32, %c0_i32_0, %c0_i32_1 : i32, i32, i32
  }
  func.func @transform_4(%arg0: i32) -> (i32, i32) {
    %c0_i32 = arith.constant 0 : i32
    %c0_i32_0 = arith.constant 0 : i32
    return %c0_i32, %arg0 : i32, i32
  }
}

</mosaic_0001>

<llo_original>
// kernel: distillation_forward.1
$region0: #{distillation_forward.1}
  #allocation0 [shape = 'u32[]', space=smem, size = 0x4, offset = 0x4, fixed_abs, tag = 'smem constant byte address 0x4 - core index']
  #allocation1 [shape = 'u32[144,128]{1,0:T(1,128)}', space=vmem, size = 0x12000, scoped, tag = 'internal scratch']
  %s0 = inlined_call_operand.vmem [shape: f32[8,512], index: 0, kind: input, shape index: {}]
  %s1 = inlined_call_operand.vmem [shape: f32[4,8,72], index: 1, kind: input, shape index: {}]
  %s2 = inlined_call_operand.vmem [shape: f32[4,8,1], index: 2, kind: input, shape index: {}]
  %s3 = inlined_call_operand.vmem [shape: f32[9,8,512], index: 3, kind: input, shape index: {}]
  %s4 = inlined_call_operand.vmem [shape: f32[8,512], index: 4, kind: output, shape index: {}]
  %s5 = sld [smem:[#allocation0]]
  $region26: #{distillation_forward.1} parent=0
    _
  %s7 = ssub.s32 1, %s5
  %s8 = scalar_select 0, %s7, %s5
  // Predicated region
  $region2: #{distillation_forward.1} parent=0 // pred_check
    _
  $region3: #{distillation_forward.1} parent=0 // pred_check_branch
    %10 = sbr.rel (0) target = $region5
  $region4: #{distillation_forward.1} parent=0 // pred_region
    _
  $region5: #{distillation_forward.1} parent=0 // pred_fallthru
    _
  // Predicated region
  $region6: #{distillation_forward.1} parent=0 // pred_check
    _
  $region7: #{distillation_forward.1} parent=0 // pred_check_branch
    %12 = sbr.rel (0) target = $region9
  $region8: #{distillation_forward.1} parent=0 // pred_region
    _
  $region9: #{distillation_forward.1} parent=0 // pred_fallthru
    _
  // Predicated region
  $region10: #{distillation_forward.1} parent=0 // pred_check
    _
  $region11: #{distillation_forward.1} parent=0 // pred_check_branch
    %14 = sbr.rel (0) target = $region13
  $region12: #{distillation_forward.1} parent=0 // pred_region
    _
  $region13: #{distillation_forward.1} parent=0 // pred_fallthru
    _
  // Predicated region
  $region14: #{distillation_forward.1} parent=0 // pred_check
    _
  $region15: #{distillation_forward.1} parent=0 // pred_check_branch
    %16 = sbr.rel (0) target = $region17
  $region16: #{distillation_forward.1} parent=0 // pred_region
    _
  $region17: #{distillation_forward.1} parent=0 // pred_fallthru
    _
  %v17 = vld [vmem:[%s0] sm:$0xff]
  %v18 = vld [vmem:[%s0 + $0x8] sm:$0xff]
  %v19 = vld [vmem:[%s0 + $0x10] sm:$0xff]
  %v20 = vld [vmem:[%s0 + $0x18] sm:$0xff]
  %v21 = vld [vmem:[%s1] sm:$0xff]
  %22 = vrot.lane.b32.xlu0 %v17, 17
  %v23 = vpop.permute.xlu0 %22
  %24 = vrot.lane.b32.xlu0 %v18, 17
  %v25 = vpop.permute.xlu0 %24
  %26 = vrot.lane.b32.xlu0 %v19, 17
  %v27 = vpop.permute.xlu0 %26
  %28 = vrot.lane.b32.xlu0 %v20, 17
  %v29 = vpop.permute.xlu0 %28
  %v30 = vlaneseq
  %v31 = vand.u32 %v30, 127
  %vm32 = vcmp.lt.s32.totalorder %v31, 17
  %v33 = vsel %vm32, %v27, %v29
  %v34 = vsel %vm32, %v25, %v27
  %v35 = vsel %vm32, %v23, %v25
  %v36 = vsel %vm32, %v29, %v23
  %v37 = vld [vmem:[%s3] sm:$0xff]
  %v38 = vld [vmem:[%s3 + $0x8] sm:$0xff]
  %v39 = vld [vmem:[%s3 + $0x10] sm:$0xff]
  %v40 = vld [vmem:[%s3 + $0x18] sm:$0xff]
  %v41 = vmul.f32 %v36, %v37
  %v42 = vmul.f32 %v35, %v38
  %v43 = vmul.f32 %v34, %v39
  %v44 = vmul.f32 %v33, %v40
  %45 = vrot.lane.b32.xlu0 %v17, 16
  %v46 = vpop.permute.xlu0 %45
  %47 = vrot.lane.b32.xlu0 %v18, 16
  %v48 = vpop.permute.xlu0 %47
  %49 = vrot.lane.b32.xlu0 %v19, 16
  %v50 = vpop.permute.xlu0 %49
  %51 = vrot.lane.b32.xlu0 %v20, 16
  %v52 = vpop.permute.xlu0 %51
  %vm53 = vcmp.lt.s32.totalorder %v31, 16
  %v54 = vsel %vm53, %v50, %v52
  %v55 = vsel %vm53, %v48, %v50
  %v56 = vsel %vm53, %v46, %v48
  %v57 = vsel %vm53, %v52, %v46
  %s58 = scalar_lea.vmem %s3, 32
  %v59 = vld [vmem:[%s58] sm:$0xff]
  %v60 = vld [vmem:[%s58 + $0x8] sm:$0xff]
  %v61 = vld [vmem:[%s58 + $0x10] sm:$0xff]
  %v62 = vld [vmem:[%s58 + $0x18] sm:$0xff]
  %v63 = vmul.f32 %v57, %v59
  %v64 = vmul.f32 %v56, %v60
  %v65 = vmul.f32 %v55, %v61
  %v66 = vmul.f32 %v54, %v62
  %67 = vrot.lane.b32.xlu0 %v17, 15
  %v68 = vpop.permute.xlu0 %67
  %69 = vrot.lane.b32.xlu0 %v18, 15
  %v70 = vpop.permute.xlu0 %69
  %71 = vrot.lane.b32.xlu0 %v19, 15
  %v72 = vpop.permute.xlu0 %71
  %73 = vrot.lane.b32.xlu0 %v20, 15
  %v74 = vpop.permute.xlu0 %73
  %vm75 = vcmp.lt.s32.totalorder %v31, 15
  %v76 = vsel %vm75, %v72, %v74
  %v77 = vsel %vm75, %v70, %v72
  %v78 = vsel %vm75, %v68, %v70
  %v79 = vsel %vm75, %v74, %v68
  %s80 = scalar_lea.vmem %s3, 64
  %v81 = vld [vmem:[%s80] sm:$0xff]
  %v82 = vld [vmem:[%s80 + $0x8] sm:$0xff]
  %v83 = vld [vmem:[%s80 + $0x10] sm:$0xff]
  %v84 = vld [vmem:[%s80 + $0x18] sm:$0xff]
  %v85 = vmul.f32 %v79, %v81
  %v86 = vmul.f32 %v78, %v82
  %v87 = vmul.f32 %v77, %v83
  %v88 = vmul.f32 %v76, %v84
  %89 = vrot.lane.b32.xlu0 %v17, 1
  %v90 = vpop.permute.xlu0 %89
  %91 = vrot.lane.b32.xlu0 %v18, 1
  %v92 = vpop.permute.xlu0 %91
  %93 = vrot.lane.b32.xlu0 %v19, 1
  %v94 = vpop.permute.xlu0 %93
  %95 = vrot.lane.b32.xlu0 %v20, 1
  %v96 = vpop.permute.xlu0 %95
  %vm97 = vcmp.lt.s32.totalorder %v31, 1
  %v98 = vsel %vm97, %v94, %v96
  %v99 = vsel %vm97, %v92, %v94
  %v100 = vsel %vm97, %v90, %v92
  %v101 = vsel %vm97, %v96, %v90
  %s102 = scalar_lea.vmem %s3, 96
  %v103 = vld [vmem:[%s102] sm:$0xff]
  %v104 = vld [vmem:[%s102 + $0x8] sm:$0xff]
  %v105 = vld [vmem:[%s102 + $0x10] sm:$0xff]
  %v106 = vld [vmem:[%s102 + $0x18] sm:$0xff]
  %v107 = vmul.f32 %v101, %v103
  %v108 = vmul.f32 %v100, %v104
  %v109 = vmul.f32 %v99, %v105
  %v110 = vmul.f32 %v98, %v106
  %111 = vrot.lane.b32.xlu0 %v17, 127
  %v112 = vpop.permute.xlu0 %111
  %113 = vrot.lane.b32.xlu0 %v18, 127
  %v114 = vpop.permute.xlu0 %113
  %115 = vrot.lane.b32.xlu0 %v19, 127
  %v116 = vpop.permute.xlu0 %115
  %117 = vrot.lane.b32.xlu0 %v20, 127
  %v118 = vpop.permute.xlu0 %117
  %vm119 = vcmp.lt.s32.totalorder %v31, 127
  %v120 = vsel %vm119, %v116, %v118
  %v121 = vsel %vm119, %v114, %v116
  %v122 = vsel %vm119, %v112, %v114
  %v123 = vsel %vm119, %v118, %v112
  %s124 = scalar_lea.vmem %s3, 160
  %v125 = vld [vmem:[%s124] sm:$0xff]
  %v126 = vld [vmem:[%s124 + $0x8] sm:$0xff]
  %v127 = vld [vmem:[%s124 + $0x10] sm:$0xff]
  %v128 = vld [vmem:[%s124 + $0x18] sm:$0xff]
  %v129 = vmul.f32 %v122, %v125
  %v130 = vmul.f32 %v121, %v126
  %v131 = vmul.f32 %v120, %v127
  %v132 = vmul.f32 %v123, %v128
  %133 = vrot.lane.b32.xlu0 %v17, 113
  %v134 = vpop.permute.xlu0 %133
  %135 = vrot.lane.b32.xlu0 %v18, 113
  %v136 = vpop.permute.xlu0 %135
  %137 = vrot.lane.b32.xlu0 %v19, 113
  %v138 = vpop.permute.xlu0 %137
  %139 = vrot.lane.b32.xlu0 %v20, 113
  %v140 = vpop.permute.xlu0 %139
  %vm141 = vcmp.lt.s32.totalorder %v31, 113
  %v142 = vsel %vm141, %v138, %v140
  %v143 = vsel %vm141, %v136, %v138
  %v144 = vsel %vm141, %v134, %v136
  %v145 = vsel %vm141, %v140, %v134
  %s146 = scalar_lea.vmem %s3, 192
  %v147 = vld [vmem:[%s146] sm:$0xff]
  %v148 = vld [vmem:[%s146 + $0x8] sm:$0xff]
  %v149 = vld [vmem:[%s146 + $0x10] sm:$0xff]
  %v150 = vld [vmem:[%s146 + $0x18] sm:$0xff]
  %v151 = vmul.f32 %v144, %v147
  %v152 = vmul.f32 %v143, %v148
  %v153 = vmul.f32 %v142, %v149
  %v154 = vmul.f32 %v145, %v150
  %155 = vrot.lane.b32.xlu0 %v17, 112
  %v156 = vpop.permute.xlu0 %155
  %157 = vrot.lane.b32.xlu0 %v18, 112
  %v158 = vpop.permute.xlu0 %157
  %159 = vrot.lane.b32.xlu0 %v19, 112
  %v160 = vpop.permute.xlu0 %159
  %161 = vrot.lane.b32.xlu0 %v20, 112
  %v162 = vpop.permute.xlu0 %161
  %vm163 = vcmp.lt.s32.totalorder %v31, 112
  %v164 = vsel %vm163, %v160, %v162
  %v165 = vsel %vm163, %v158, %v160
  %v166 = vsel %vm163, %v156, %v158
  %v167 = vsel %vm163, %v162, %v156
  %s168 = scalar_lea.vmem %s3, 224
  %v169 = vld [vmem:[%s168] sm:$0xff]
  %v170 = vld [vmem:[%s168 + $0x8] sm:$0xff]
  %v171 = vld [vmem:[%s168 + $0x10] sm:$0xff]
  %v172 = vld [vmem:[%s168 + $0x18] sm:$0xff]
  %v173 = vmul.f32 %v166, %v169
  %v174 = vmul.f32 %v165, %v170
  %v175 = vmul.f32 %v164, %v171
  %v176 = vmul.f32 %v167, %v172
  %177 = vrot.lane.b32.xlu0 %v17, 111
  %v178 = vpop.permute.xlu0 %177
  %179 = vrot.lane.b32.xlu0 %v18, 111
  %v180 = vpop.permute.xlu0 %179
  %181 = vrot.lane.b32.xlu0 %v19, 111
  %v182 = vpop.permute.xlu0 %181
  %183 = vrot.lane.b32.xlu0 %v20, 111
  %v184 = vpop.permute.xlu0 %183
  %vm185 = vcmp.lt.s32.totalorder %v31, 111
  %v186 = vsel %vm185, %v182, %v184
  %v187 = vsel %vm185, %v180, %v182
  %v188 = vsel %vm185, %v178, %v180
  %v189 = vsel %vm185, %v184, %v178
  %s190 = scalar_lea.vmem %s3, 256
  %v191 = vld [vmem:[%s190] sm:$0xff]
  %v192 = vld [vmem:[%s190 + $0x8] sm:$0xff]
  %v193 = vld [vmem:[%s190 + $0x10] sm:$0xff]
  %v194 = vld [vmem:[%s190 + $0x18] sm:$0xff]
  %v195 = vmul.f32 %v188, %v191
  %v196 = vmul.f32 %v187, %v192
  %v197 = vmul.f32 %v186, %v193
  %v198 = vmul.f32 %v189, %v194
  %v199 = vld [vmem:[%s2] sm:$0xff]
  %201 = vset.pattern.permute.xlu0 0
  %202 = vperm.xlu0 %201, %v199
  %v203 = vpop.permute.xlu0 %202
  %vm205 = vcmask 588800
  %v207 = vsel %vm205, %v21, 0
  %209 = vmatprep.subr.mxu0 %v42
  %210 = vmatpush1.msra.mxu0 %v41
  %211 = vmatprep.subr.mxu0 %v64
  %212 = vmatpush1.msra.mxu0 %v63
  %213 = vmatprep.subr.mxu0 %v86
  %214 = vmatpush1.msra.mxu0 %v85
  %215 = vmatprep.subr.mxu0 %v108
  %216 = vmatpush1.msra.mxu0 %v107
  %217 = vmatprep.subr.mxu0 %v18
  %218 = vmatpush1.msra.mxu0 %v17
  %219 = vmatprep.subr.mxu0 %v130
  %220 = vmatpush1.msra.mxu0 %v129
  %221 = vmatprep.subr.mxu0 %v152
  %222 = vmatpush1.msra.mxu0 %v151
  %223 = vmatprep.subr.mxu0 %v174
  %224 = vmatpush1.msra.mxu0 %v173
  %225 = vmatprep.subr.mxu0 %v196
  %226 = vmatpush1.msra.mxu0 %v195
  %227 = vmatprep.subr.mxu0 0.0
  %228 = vmatpush1.msra.mxu0 0.0
  %229 = vmatprep.subr.mxu0 0.0
  %230 = vmatpush1.msra.mxu0 0.0
  %231 = vmatprep.subr.mxu0 0.0
  %232 = vmatpush1.msra.mxu0 0.0
  %233 = vmatprep.subr.mxu0 0.0
  %234 = vmatpush1.msra.mxu0 0.0
  %235 = vmatprep.subr.mxu0 0.0
  %236 = vmatpush1.msra.mxu0 0.0
  %237 = vmatprep.subr.mxu0 0.0
  %238 = vmatpush1.msra.mxu0 0.0
  %239 = vmatprep.subr.mxu0 0.0
  %240 = vmatpush1.msra.mxu0 0.0
  %241 = vmatprep.subr.mxu0 0.0
  %242 = vmatpush1.msra.mxu0 0.0
  %243 = vmatprep.subr.mxu0 0.0
  %244 = vmatpush1.msra.mxu0 0.0
  %245 = vmatprep.subr.mxu0 0.0
  %246 = vmatpush1.msra.mxu0 0.0
  %247 = vmatprep.subr.mxu0 0.0
  %248 = vmatpush1.msra.mxu0 0.0
  %249 = vmatprep.subr.mxu0 0.0
  %250 = vmatpush1.msra.mxu0 0.0
  %251 = vmatprep.subr.mxu0 0.0
  %252 = vmatpush1.msra.mxu0 0.0
  %253 = vmatprep.subr.mxu0 0.0
  %254 = vmatpush1.msra.mxu0 0.0
  %255 = vmatprep.subr.mxu0 0.0
  %256 = vmatpush1.msra.mxu0 0.0
  %257 = vmatprep.subr.mxu0 0.0
  %258 = vmatpush1.msra.mxu0 0.0
  %259 = vmatprep.subr.mxu0 0.0
  %260 = vmatpush1.msra.mxu0 0.0
  %261 = vmatprep.subr.mxu0 0.0
  %262 = vmatpush1.msra.mxu0 0.0
  %263 = vmatprep.subr.mxu0 0.0
  %264 = vmatpush1.msra.mxu0 0.0
  %265 = vmatprep.subr.mxu0 0.0
  %266 = vmatpush1.msra.mxu0 0.0
  %267 = vmatprep.subr.mxu0 0.0
  %268 = vmatpush1.msra.mxu0 0.0
  %269 = vmatprep.subr.mxu0 0.0
  %270 = vmatpush1.msra.mxu0 0.0
  %271 = vmatprep.subr.mxu0 0.0
  %272 = vmatpush1.msra.mxu0 0.0
  %273 = vmatprep.mubr.f32.mxu0 0.0
  %274 = vmatmul.mubr.f32.gmra.mrb[0].mxu0 %v207
  %v275 = vpop.f32.mrb[0].mxu0
  %v276 = vadd.f32 %v203, %v275
  %v277 = vpop.f32.mrb[0].mxu0
  %v278 = vadd.f32 %v203, %v277
  %279 = vdwg.mxu0
  %280 = vmatprep.subr.mxu0 %v44
  %281 = vmatpush1.msra.mxu0 %v43
  %282 = vmatprep.subr.mxu0 %v66
  %283 = vmatpush1.msra.mxu0 %v65
  %284 = vmatprep.subr.mxu0 %v88
  %285 = vmatpush1.msra.mxu0 %v87
  %286 = vmatprep.subr.mxu0 %v110
  %287 = vmatpush1.msra.mxu0 %v109
  %288 = vmatprep.subr.mxu0 %v20
  %289 = vmatpush1.msra.mxu0 %v19
  %290 = vmatprep.subr.mxu0 %v132
  %291 = vmatpush1.msra.mxu0 %v131
  %292 = vmatprep.subr.mxu0 %v154
  %293 = vmatpush1.msra.mxu0 %v153
  %294 = vmatprep.subr.mxu0 %v176
  %295 = vmatpush1.msra.mxu0 %v175
  %296 = vmatprep.subr.mxu0 %v198
  %297 = vmatpush1.msra.mxu0 %v197
  %298 = vmatprep.subr.mxu0 0.0
  %299 = vmatpush1.msra.mxu0 0.0
  %300 = vmatprep.subr.mxu0 0.0
  %301 = vmatpush1.msra.mxu0 0.0
  %302 = vmatprep.subr.mxu0 0.0
  %303 = vmatpush1.msra.mxu0 0.0
  %304 = vmatprep.subr.mxu0 0.0
  %305 = vmatpush1.msra.mxu0 0.0
  %306 = vmatprep.subr.mxu0 0.0
  %307 = vmatpush1.msra.mxu0 0.0
  %308 = vmatprep.subr.mxu0 0.0
  %309 = vmatpush1.msra.mxu0 0.0
  %310 = vmatprep.subr.mxu0 0.0
  %311 = vmatpush1.msra.mxu0 0.0
  %312 = vmatprep.subr.mxu0 0.0
  %313 = vmatpush1.msra.mxu0 0.0
  %314 = vmatprep.subr.mxu0 0.0
  %315 = vmatpush1.msra.mxu0 0.0
  %316 = vmatprep.subr.mxu0 0.0
  %317 = vmatpush1.msra.mxu0 0.0
  %318 = vmatprep.subr.mxu0 0.0
  %319 = vmatpush1.msra.mxu0 0.0
  %320 = vmatprep.subr.mxu0 0.0
  %321 = vmatpush1.msra.mxu0 0.0
  %322 = vmatprep.subr.mxu0 0.0
  %323 = vmatpush1.msra.mxu0 0.0
  %324 = vmatprep.subr.mxu0 0.0
  %325 = vmatpush1.msra.mxu0 0.0
  %326 = vmatprep.subr.mxu0 0.0
  %327 = vmatpush1.msra.mxu0 0.0
  %328 = vmatprep.subr.mxu0 0.0
  %329 = vmatpush1.msra.mxu0 0.0
  %330 = vmatprep.subr.mxu0 0.0
  %331 = vmatpush1.msra.mxu0 0.0
  %332 = vmatprep.subr.mxu0 0.0
  %333 = vmatpush1.msra.mxu0 0.0
  %334 = vmatprep.subr.mxu0 0.0
  %335 = vmatpush1.msra.mxu0 0.0
  %336 = vmatprep.subr.mxu0 0.0
  %337 = vmatpush1.msra.mxu0 0.0
  %338 = vmatprep.subr.mxu0 0.0
  %339 = vmatpush1.msra.mxu0 0.0
  %340 = vmatprep.subr.mxu0 0.0
  %341 = vmatpush1.msra.mxu0 0.0
  %342 = vmatprep.subr.mxu0 0.0
  %343 = vmatpush1.msra.mxu0 0.0
  %344 = vmatprep.mubr.f32.mxu0 0.0
  %345 = vmatmul.mubr.f32.gmra.mrb[0].mxu0 %v207
  %v346 = vpop.f32.mrb[0].mxu0
  %v347 = vadd.f32 %v203, %v346
  %v348 = vpop.f32.mrb[0].mxu0
  %v349 = vadd.f32 %v203, %v348
  %350 = vdwg.mxu0
  %vm351 = vcmp.ge.f32.partialorder %v276, 0.0
  %vm352 = vcmp.ge.f32.partialorder %v278, 0.0
  %vm353 = vcmp.ge.f32.partialorder %v347, 0.0
  %vm354 = vcmp.ge.f32.partialorder %v349, 0.0
  %v355 = vmul.f32 %v276, 0.05
  %v356 = vmul.f32 %v278, 0.05
  %v357 = vmul.f32 %v347, 0.05
  %v358 = vmul.f32 %v349, 0.05
  %v359 = vsel %vm351, %v276, %v355
  %v360 = vsel %vm352, %v278, %v356
  %v361 = vsel %vm353, %v347, %v357
  %v362 = vsel %vm354, %v349, %v358
  %s363 = scalar_lea.vmem %s1, 8
  %v364 = vld [vmem:[%s363] sm:$0xff]
  %365 = vrot.lane.b32.xlu0 %v359, 17
  %v366 = vpop.permute.xlu0 %365
  %367 = vrot.lane.b32.xlu0 %v360, 17
  %v368 = vpop.permute.xlu0 %367
  %369 = vrot.lane.b32.xlu0 %v361, 17
  %v370 = vpop.permute.xlu0 %369
  %371 = vrot.lane.b32.xlu0 %v362, 17
  %v372 = vpop.permute.xlu0 %371
  %v373 = vsel %vm32, %v370, %v372
  %v374 = vsel %vm32, %v368, %v370
  %v375 = vsel %vm32, %v366, %v368
  %v376 = vsel %vm32, %v372, %v366
  %v377 = vmul.f32 %v376, %v37
  %v378 = vmul.f32 %v375, %v38
  %v379 = vmul.f32 %v374, %v39
  %v380 = vmul.f32 %v373, %v40
  %381 = vrot.lane.b32.xlu0 %v359, 16
  %v382 = vpop.permute.xlu0 %381
  %383 = vrot.lane.b32.xlu0 %v360, 16
  %v384 = vpop.permute.xlu0 %383
  %385 = vrot.lane.b32.xlu0 %v361, 16
  %v386 = vpop.permute.xlu0 %385
  %387 = vrot.lane.b32.xlu0 %v362, 16
  %v388 = vpop.permute.xlu0 %387
  %v389 = vsel %vm53, %v386, %v388
  %v390 = vsel %vm53, %v384, %v386
  %v391 = vsel %vm53, %v382, %v384
  %v392 = vsel %vm53, %v388, %v382
  %v393 = vmul.f32 %v392, %v59
  %v394 = vmul.f32 %v391, %v60
  %v395 = vmul.f32 %v390, %v61
  %v396 = vmul.f32 %v389, %v62
  %397 = vrot.lane.b32.xlu0 %v359, 15
  %v398 = vpop.permute.xlu0 %397
  %399 = vrot.lane.b32.xlu0 %v360, 15
  %v400 = vpop.permute.xlu0 %399
  %401 = vrot.lane.b32.xlu0 %v361, 15
  %v402 = vpop.permute.xlu0 %401
  %403 = vrot.lane.b32.xlu0 %v362, 15
  %v404 = vpop.permute.xlu0 %403
  %v405 = vsel %vm75, %v402, %v404
  %v406 = vsel %vm75, %v400, %v402
  %v407 = vsel %vm75, %v398, %v400
  %v408 = vsel %vm75, %v404, %v398
  %v409 = vmul.f32 %v408, %v81
  %v410 = vmul.f32 %v407, %v82
  %v411 = vmul.f32 %v406, %v83
  %v412 = vmul.f32 %v405, %v84
  %413 = vrot.lane.b32.xlu0 %v359, 1
  %v414 = vpop.permute.xlu0 %413
  %415 = vrot.lane.b32.xlu0 %v360, 1
  %v416 = vpop.permute.xlu0 %415
  %417 = vrot.lane.b32.xlu0 %v361, 1
  %v418 = vpop.permute.xlu0 %417
  %419 = vrot.lane.b32.xlu0 %v362, 1
  %v420 = vpop.permute.xlu0 %419
  %v421 = vsel %vm97, %v418, %v420
  %v422 = vsel %vm97, %v416, %v418
  %v423 = vsel %vm97, %v414, %v416
  %v424 = vsel %vm97, %v420, %v414
  %v425 = vmul.f32 %v424, %v103
  %v426 = vmul.f32 %v423, %v104
  %v427 = vmul.f32 %v422, %v105
  %v428 = vmul.f32 %v421, %v106
  %429 = vrot.lane.b32.xlu0 %v359, 127
  %v430 = vpop.permute.xlu0 %429
  %431 = vrot.lane.b32.xlu0 %v360, 127
  %v432 = vpop.permute.xlu0 %431
  %433 = vrot.lane.b32.xlu0 %v361, 127
  %v434 = vpop.permute.xlu0 %433
  %435 = vrot.lane.b32.xlu0 %v362, 127
  %v436 = vpop.permute.xlu0 %435
  %v437 = vsel %vm119, %v434, %v436
  %v438 = vsel %vm119, %v432, %v434
  %v439 = vsel %vm119, %v430, %v432
  %v440 = vsel %vm119, %v436, %v430
  %v441 = vmul.f32 %v439, %v125
  %v442 = vmul.f32 %v438, %v126
  %v443 = vmul.f32 %v437, %v127
  %v444 = vmul.f32 %v440, %v128
  %445 = vrot.lane.b32.xlu0 %v359, 113
  %v446 = vpop.permute.xlu0 %445
  %447 = vrot.lane.b32.xlu0 %v360, 113
  %v448 = vpop.permute.xlu0 %447
  %449 = vrot.lane.b32.xlu0 %v361, 113
  %v450 = vpop.permute.xlu0 %449
  %451 = vrot.lane.b32.xlu0 %v362, 113
  %v452 = vpop.permute.xlu0 %451
  %v453 = vsel %vm141, %v450, %v452
  %v454 = vsel %vm141, %v448, %v450
  %v455 = vsel %vm141, %v446, %v448
  %v456 = vsel %vm141, %v452, %v446
  %v457 = vmul.f32 %v455, %v147
  %v458 = vmul.f32 %v454, %v148
  %v459 = vmul.f32 %v453, %v149
  %v460 = vmul.f32 %v456, %v150
  %461 = vrot.lane.b32.xlu0 %v359, 112
  %v462 = vpop.permute.xlu0 %461
  %463 = vrot.lane.b32.xlu0 %v360, 112
  %v464 = vpop.permute.xlu0 %463
  %465 = vrot.lane.b32.xlu0 %v361, 112
  %v466 = vpop.permute.xlu0 %465
  %467 = vrot.lane.b32.xlu0 %v362, 112
  %v468 = vpop.permute.xlu0 %467
  %v469 = vsel %vm163, %v466, %v468
  %v470 = vsel %vm163, %v464, %v466
  %v471 = vsel %vm163, %v462, %v464
  %v472 = vsel %vm163, %v468, %v462
  %v473 = vmul.f32 %v471, %v169
  %v474 = vmul.f32 %v470, %v170
  %v475 = vmul.f32 %v469, %v171
  %v476 = vmul.f32 %v472, %v172
  %477 = vrot.lane.b32.xlu0 %v359, 111
  %v478 = vpop.permute.xlu0 %477
  %479 = vrot.lane.b32.xlu0 %v360, 111
  %v480 = vpop.permute.xlu0 %479
  %481 = vrot.lane.b32.xlu0 %v361, 111
  %v482 = vpop.permute.xlu0 %481
  %483 = vrot.lane.b32.xlu0 %v362, 111
  %v484 = vpop.permute.xlu0 %483
  %v485 = vsel %vm185, %v482, %v484
  %v486 = vsel %vm185, %v480, %v482
  %v487 = vsel %vm185, %v478, %v480
  %v488 = vsel %vm185, %v484, %v478
  %v489 = vmul.f32 %v487, %v191
  %v490 = vmul.f32 %v486, %v192
  %v491 = vmul.f32 %v485, %v193
  %v492 = vmul.f32 %v488, %v194
  %s493 = scalar_lea.vmem %s2, 8
  %v494 = vld [vmem:[%s493] sm:$0xff]
  %496 = vset.pattern.permute.xlu0 0
  %497 = vperm.xlu0 %496, %v494
  %v498 = vpop.permute.xlu0 %497
  %v501 = vsel %vm205, %v364, 0
  %503 = vmatprep.subr.mxu0 %v378
  %504 = vmatpush1.msra.mxu0 %v377
  %505 = vmatprep.subr.mxu0 %v394
  %506 = vmatpush1.msra.mxu0 %v393
  %507 = vmatprep.subr.mxu0 %v410
  %508 = vmatpush1.msra.mxu0 %v409
  %509 = vmatprep.subr.mxu0 %v426
  %510 = vmatpush1.msra.mxu0 %v425
  %511 = vmatprep.subr.mxu0 %v360
  %512 = vmatpush1.msra.mxu0 %v359
  %513 = vmatprep.subr.mxu0 %v442
  %514 = vmatpush1.msra.mxu0 %v441
  %515 = vmatprep.subr.mxu0 %v458
  %516 = vmatpush1.msra.mxu0 %v457
  %517 = vmatprep.subr.mxu0 %v474
  %518 = vmatpush1.msra.mxu0 %v473
  %519 = vmatprep.subr.mxu0 %v490
  %520 = vmatpush1.msra.mxu0 %v489
  %521 = vmatprep.subr.mxu0 0.0
  %522 = vmatpush1.msra.mxu0 0.0
  %523 = vmatprep.subr.mxu0 0.0
  %524 = vmatpush1.msra.mxu0 0.0
  %525 = vmatprep.subr.mxu0 0.0
  %526 = vmatpush1.msra.mxu0 0.0
  %527 = vmatprep.subr.mxu0 0.0
  %528 = vmatpush1.msra.mxu0 0.0
  %529 = vmatprep.subr.mxu0 0.0
  %530 = vmatpush1.msra.mxu0 0.0
  %531 = vmatprep.subr.mxu0 0.0
  %532 = vmatpush1.msra.mxu0 0.0
  %533 = vmatprep.subr.mxu0 0.0
  %534 = vmatpush1.msra.mxu0 0.0
  %535 = vmatprep.subr.mxu0 0.0
  %536 = vmatpush1.msra.mxu0 0.0
  %537 = vmatprep.subr.mxu0 0.0
  %538 = vmatpush1.msra.mxu0 0.0
  %539 = vmatprep.subr.mxu0 0.0
  %540 = vmatpush1.msra.mxu0 0.0
  %541 = vmatprep.subr.mxu0 0.0
  %542 = vmatpush1.msra.mxu0 0.0
  %543 = vmatprep.subr.mxu0 0.0
  %544 = vmatpush1.msra.mxu0 0.0
  %545 = vmatprep.subr.mxu0 0.0
  %546 = vmatpush1.msra.mxu0 0.0
  %547 = vmatprep.subr.mxu0 0.0
  %548 = vmatpush1.msra.mxu0 0.0
  %549 = vmatprep.subr.mxu0 0.0
  %550 = vmatpush1.msra.mxu0 0.0
  %551 = vmatprep.subr.mxu0 0.0
  %552 = vmatpush1.msra.mxu0 0.0
  %553 = vmatprep.subr.mxu0 0.0
  %554 = vmatpush1.msra.mxu0 0.0
  %555 = vmatprep.subr.mxu0 0.0
  %556 = vmatpush1.msra.mxu0 0.0
  %557 = vmatprep.subr.mxu0 0.0
  %558 = vmatpush1.msra.mxu0 0.0
  %559 = vmatprep.subr.mxu0 0.0
  %560 = vmatpush1.msra.mxu0 0.0
  %561 = vmatprep.subr.mxu0 0.0
  %562 = vmatpush1.msra.mxu0 0.0
  %563 = vmatprep.subr.mxu0 0.0
  %564 = vmatpush1.msra.mxu0 0.0
  %565 = vmatprep.subr.mxu0 0.0
  %566 = vmatpush1.msra.mxu0 0.0
  %567 = vmatprep.mubr.f32.mxu0 0.0
  %568 = vmatmul.mubr.f32.gmra.mrb[0].mxu0 %v501
  %v569 = vpop.f32.mrb[0].mxu0
  %v570 = vadd.f32 %v498, %v569
  %v571 = vpop.f32.mrb[0].mxu0
  %v572 = vadd.f32 %v498, %v571
  %573 = vdwg.mxu0
  %574 = vmatprep.subr.mxu0 %v380
  %575 = vmatpush1.msra.mxu0 %v379
  %576 = vmatprep.subr.mxu0 %v396
  %577 = vmatpush1.msra.mxu0 %v395
  %578 = vmatprep.subr.mxu0 %v412
  %579 = vmatpush1.msra.mxu0 %v411
  %580 = vmatprep.subr.mxu0 %v428
  %581 = vmatpush1.msra.mxu0 %v427
  %582 = vmatprep.subr.mxu0 %v362
  %583 = vmatpush1.msra.mxu0 %v361
  %584 = vmatprep.subr.mxu0 %v444
  %585 = vmatpush1.msra.mxu0 %v443
  %586 = vmatprep.subr.mxu0 %v460
  %587 = vmatpush1.msra.mxu0 %v459
  %588 = vmatprep.subr.mxu0 %v476
  %589 = vmatpush1.msra.mxu0 %v475
  %590 = vmatprep.subr.mxu0 %v492
  %591 = vmatpush1.msra.mxu0 %v491
  %592 = vmatprep.subr.mxu0 0.0
  %593 = vmatpush1.msra.mxu0 0.0
  %594 = vmatprep.subr.mxu0 0.0
  %595 = vmatpush1.msra.mxu0 0.0
  %596 = vmatprep.subr.mxu0 0.0
  %597 = vmatpush1.msra.mxu0 0.0
  %598 = vmatprep.subr.mxu0 0.0
  %599 = vmatpush1.msra.mxu0 0.0
  %600 = vmatprep.subr.mxu0 0.0
  %601 = vmatpush1.msra.mxu0 0.0
  %602 = vmatprep.subr.mxu0 0.0
  %603 = vmatpush1.msra.mxu0 0.0
  %604 = vmatprep.subr.mxu0 0.0
  %605 = vmatpush1.msra.mxu0 0.0
  %606 = vmatprep.subr.mxu0 0.0
  %607 = vmatpush1.msra.mxu0 0.0
  %608 = vmatprep.subr.mxu0 0.0
  %609 = vmatpush1.msra.mxu0 0.0
  %610 = vmatprep.subr.mxu0 0.0
  %611 = vmatpush1.msra.mxu0 0.0
  %612 = vmatprep.subr.mxu0 0.0
  %613 = vmatpush1.msra.mxu0 0.0
  %614 = vmatprep.subr.mxu0 0.0
  %615 = vmatpush1.msra.mxu0 0.0
  %616 = vmatprep.subr.mxu0 0.0
  %617 = vmatpush1.msra.mxu0 0.0
  %618 = vmatprep.subr.mxu0 0.0
  %619 = vmatpush1.msra.mxu0 0.0
  %620 = vmatprep.subr.mxu0 0.0
  %621 = vmatpush1.msra.mxu0 0.0
  %622 = vmatprep.subr.mxu0 0.0
  %623 = vmatpush1.msra.mxu0 0.0
  %624 = vmatprep.subr.mxu0 0.0
  %625 = vmatpush1.msra.mxu0 0.0
  %626 = vmatprep.subr.mxu0 0.0
  %627 = vmatpush1.msra.mxu0 0.0
  %628 = vmatprep.subr.mxu0 0.0
  %629 = vmatpush1.msra.mxu0 0.0
  %630 = vmatprep.subr.mxu0 0.0
  %631 = vmatpush1.msra.mxu0 0.0
  %632 = vmatprep.subr.mxu0 0.0
  %633 = vmatpush1.msra.mxu0 0.0
  %634 = vmatprep.subr.mxu0 0.0
  %635 = vmatpush1.msra.mxu0 0.0
  %636 = vmatprep.subr.mxu0 0.0
  %637 = vmatpush1.msra.mxu0 0.0
  %638 = vmatprep.mubr.f32.mxu0 0.0
  %639 = vmatmul.mubr.f32.gmra.mrb[0].mxu0 %v501
  %v640 = vpop.f32.mrb[0].mxu0
  %v641 = vadd.f32 %v498, %v640
  %v642 = vpop.f32.mrb[0].mxu0
  %v643 = vadd.f32 %v498, %v642
  %644 = vdwg.mxu0
  %vm645 = vcmp.ge.f32.partialorder %v570, 0.0
  %vm646 = vcmp.ge.f32.partialorder %v572, 0.0
  %vm647 = vcmp.ge.f32.partialorder %v641, 0.0
  %vm648 = vcmp.ge.f32.partialorder %v643, 0.0
  %v649 = vmul.f32 %v570, 0.05
  %v650 = vmul.f32 %v572, 0.05
  %v651 = vmul.f32 %v641, 0.05
  %v652 = vmul.f32 %v643, 0.05
  %v653 = vsel %vm645, %v570, %v649
  %v654 = vsel %vm646, %v572, %v650
  %v655 = vsel %vm647, %v641, %v651
  %v656 = vsel %vm648, %v643, %v652
  %s657 = scalar_lea.vmem %s1, 16
  %v658 = vld [vmem:[%s657] sm:$0xff]
  %659 = vrot.lane.b32.xlu0 %v653, 17
  %v660 = vpop.permute.xlu0 %659
  %661 = vrot.lane.b32.xlu0 %v654, 17
  %v662 = vpop.permute.xlu0 %661
  %663 = vrot.lane.b32.xlu0 %v655, 17
  %v664 = vpop.permute.xlu0 %663
  %665 = vrot.lane.b32.xlu0 %v656, 17
  %v666 = vpop.permute.xlu0 %665
  %v667 = vsel %vm32, %v664, %v666
  %v668 = vsel %vm32, %v662, %v664
  %v669 = vsel %vm32, %v660, %v662
  %v670 = vsel %vm32, %v666, %v660
  %v671 = vmul.f32 %v670, %v37
  %v672 = vmul.f32 %v669, %v38
  %v673 = vmul.f32 %v668, %v39
  %v674 = vmul.f32 %v667, %v40
  %675 = vrot.lane.b32.xlu0 %v653, 16
  %v676 = vpop.permute.xlu0 %675
  %677 = vrot.lane.b32.xlu0 %v654, 16
  %v678 = vpop.permute.xlu0 %677
  %679 = vrot.lane.b32.xlu0 %v655, 16
  %v680 = vpop.permute.xlu0 %679
  %681 = vrot.lane.b32.xlu0 %v656, 16
  %v682 = vpop.permute.xlu0 %681
  %v683 = vsel %vm53, %v680, %v682
  %v684 = vsel %vm53, %v678, %v680
  %v685 = vsel %vm53, %v676, %v678
  %v686 = vsel %vm53, %v682, %v676
  %v687 = vmul.f32 %v686, %v59
  %v688 = vmul.f32 %v685, %v60
  %v689 = vmul.f32 %v684, %v61
  %v690 = vmul.f32 %v683, %v62
  %691 = vrot.lane.b32.xlu0 %v653, 15
  %v692 = vpop.permute.xlu0 %691
  %693 = vrot.lane.b32.xlu0 %v654, 15
  %v694 = vpop.permute.xlu0 %693
  %695 = vrot.lane.b32.xlu0 %v655, 15
  %v696 = vpop.permute.xlu0 %695
  %697 = vrot.lane.b32.xlu0 %v656, 15
  %v698 = vpop.permute.xlu0 %697
  %v699 = vsel %vm75, %v696, %v698
  %v700 = vsel %vm75, %v694, %v696
  %v701 = vsel %vm75, %v692, %v694
  %v702 = vsel %vm75, %v698, %v692
  %v703 = vmul.f32 %v702, %v81
  %v704 = vmul.f32 %v701, %v82
  %v705 = vmul.f32 %v700, %v83
  %v706 = vmul.f32 %v699, %v84
  %707 = vrot.lane.b32.xlu0 %v653, 1
  %v708 = vpop.permute.xlu0 %707
  %709 = vrot.lane.b32.xlu0 %v654, 1
  %v710 = vpop.permute.xlu0 %709
  %711 = vrot.lane.b32.xlu0 %v655, 1
  %v712 = vpop.permute.xlu0 %711
  %713 = vrot.lane.b32.xlu0 %v656, 1
  %v714 = vpop.permute.xlu0 %713
  %v715 = vsel %vm97, %v712, %v714
  %v716 = vsel %vm97, %v710, %v712
  %v717 = vsel %vm97, %v708, %v710
  %v718 = vsel %vm97, %v714, %v708
  %v719 = vmul.f32 %v718, %v103
  %v720 = vmul.f32 %v717, %v104
  %v721 = vmul.f32 %v716, %v105
  %v722 = vmul.f32 %v715, %v106
  %723 = vrot.lane.b32.xlu0 %v653, 127
  %v724 = vpop.permute.xlu0 %723
  %725 = vrot.lane.b32.xlu0 %v654, 127
  %v726 = vpop.permute.xlu0 %725
  %727 = vrot.lane.b32.xlu0 %v655, 127
  %v728 = vpop.permute.xlu0 %727
  %729 = vrot.lane.b32.xlu0 %v656, 127
  %v730 = vpop.permute.xlu0 %729
  %v731 = vsel %vm119, %v728, %v730
  %v732 = vsel %vm119, %v726, %v728
  %v733 = vsel %vm119, %v724, %v726
  %v734 = vsel %vm119, %v730, %v724
  %v735 = vmul.f32 %v733, %v125
  %v736 = vmul.f32 %v732, %v126
  %v737 = vmul.f32 %v731, %v127
  %v738 = vmul.f32 %v734, %v128
  %739 = vrot.lane.b32.xlu0 %v653, 113
  %v740 = vpop.permute.xlu0 %739
  %741 = vrot.lane.b32.xlu0 %v654, 113
  %v742 = vpop.permute.xlu0 %741
  %743 = vrot.lane.b32.xlu0 %v655, 113
  %v744 = vpop.permute.xlu0 %743
  %745 = vrot.lane.b32.xlu0 %v656, 113
  %v746 = vpop.permute.xlu0 %745
  %v747 = vsel %vm141, %v744, %v746
  %v748 = vsel %vm141, %v742, %v744
  %v749 = vsel %vm141, %v740, %v742
  %v750 = vsel %vm141, %v746, %v740
  %v751 = vmul.f32 %v749, %v147
  %v752 = vmul.f32 %v748, %v148
  %v753 = vmul.f32 %v747, %v149
  %v754 = vmul.f32 %v750, %v150
  %755 = vrot.lane.b32.xlu0 %v653, 112
  %v756 = vpop.permute.xlu0 %755
  %757 = vrot.lane.b32.xlu0 %v654, 112
  %v758 = vpop.permute.xlu0 %757
  %759 = vrot.lane.b32.xlu0 %v655, 112
  %v760 = vpop.permute.xlu0 %759
  %761 = vrot.lane.b32.xlu0 %v656, 112
  %v762 = vpop.permute.xlu0 %761
  %v763 = vsel %vm163, %v760, %v762
  %v764 = vsel %vm163, %v758, %v760
  %v765 = vsel %vm163, %v756, %v758
  %v766 = vsel %vm163, %v762, %v756
  %v767 = vmul.f32 %v765, %v169
  %v768 = vmul.f32 %v764, %v170
  %v769 = vmul.f32 %v763, %v171
  %v770 = vmul.f32 %v766, %v172
  %771 = vrot.lane.b32.xlu0 %v653, 111
  %v772 = vpop.permute.xlu0 %771
  %773 = vrot.lane.b32.xlu0 %v654, 111
  %v774 = vpop.permute.xlu0 %773
  %775 = vrot.lane.b32.xlu0 %v655, 111
  %v776 = vpop.permute.xlu0 %775
  %777 = vrot.lane.b32.xlu0 %v656, 111
  %v778 = vpop.permute.xlu0 %777
  %v779 = vsel %vm185, %v776, %v778
  %v780 = vsel %vm185, %v774, %v776
  %v781 = vsel %vm185, %v772, %v774
  %v782 = vsel %vm185, %v778, %v772
  %v783 = vmul.f32 %v781, %v191
  %v784 = vmul.f32 %v780, %v192
  %v785 = vmul.f32 %v779, %v193
  %v786 = vmul.f32 %v782, %v194
  %s787 = scalar_lea.vmem %s2, 16
  %v788 = vld [vmem:[%s787] sm:$0xff]
  %790 = vset.pattern.permute.xlu0 0
  %791 = vperm.xlu0 %790, %v788
  %v792 = vpop.permute.xlu0 %791
  %v795 = vsel %vm205, %v658, 0
  %797 = vmatprep.subr.mxu0 %v672
  %798 = vmatpush1.msra.mxu0 %v671
  %799 = vmatprep.subr.mxu0 %v688
  %800 = vmatpush1.msra.mxu0 %v687
  %801 = vmatprep.subr.mxu0 %v704
  %802 = vmatpush1.msra.mxu0 %v703
  %803 = vmatprep.subr.mxu0 %v720
  %804 = vmatpush1.msra.mxu0 %v719
  %805 = vmatprep.subr.mxu0 %v654
  %806 = vmatpush1.msra.mxu0 %v653
  %807 = vmatprep.subr.mxu0 %v736
  %808 = vmatpush1.msra.mxu0 %v735
  %809 = vmatprep.subr.mxu0 %v752
  %810 = vmatpush1.msra.mxu0 %v751
  %811 = vmatprep.subr.mxu0 %v768
  %812 = vmatpush1.msra.mxu0 %v767
  %813 = vmatprep.subr.mxu0 %v784
  %814 = vmatpush1.msra.mxu0 %v783
  %815 = vmatprep.subr.mxu0 0.0
  %816 = vmatpush1.msra.mxu0 0.0
  %817 = vmatprep.subr.mxu0 0.0
  %818 = vmatpush1.msra.mxu0 0.0
  %819 = vmatprep.subr.mxu0 0.0
  %820 = vmatpush1.msra.mxu0 0.0
  %821 = vmatprep.subr.mxu0 0.0
  %822 = vmatpush1.msra.mxu0 0.0
  %823 = vmatprep.subr.mxu0 0.0
  %824 = vmatpush1.msra.mxu0 0.0
  %825 = vmatprep.subr.mxu0 0.0
  %826 = vmatpush1.msra.mxu0 0.0
  %827 = vmatprep.subr.mxu0 0.0
  %828 = vmatpush1.msra.mxu0 0.0
  %829 = vmatprep.subr.mxu0 0.0
  %830 = vmatpush1.msra.mxu0 0.0
  %831 = vmatprep.subr.mxu0 0.0
  %832 = vmatpush1.msra.mxu0 0.0
  %833 = vmatprep.subr.mxu0 0.0
  %834 = vmatpush1.msra.mxu0 0.0
  %835 = vmatprep.subr.mxu0 0.0
  %836 = vmatpush1.msra.mxu0 0.0
  %837 = vmatprep.subr.mxu0 0.0
  %838 = vmatpush1.msra.mxu0 0.0
  %839 = vmatprep.subr.mxu0 0.0
  %840 = vmatpush1.msra.mxu0 0.0
  %841 = vmatprep.subr.mxu0 0.0
  %842 = vmatpush1.msra.mxu0 0.0
  %843 = vmatprep.subr.mxu0 0.0
  %844 = vmatpush1.msra.mxu0 0.0
  %845 = vmatprep.subr.mxu0 0.0
  %846 = vmatpush1.msra.mxu0 0.0
  %847 = vmatprep.subr.mxu0 0.0
  %848 = vmatpush1.msra.mxu0 0.0
  %849 = vmatprep.subr.mxu0 0.0
  %850 = vmatpush1.msra.mxu0 0.0
  %851 = vmatprep.subr.mxu0 0.0
  %852 = vmatpush1.msra.mxu0 0.0
  %853 = vmatprep.subr.mxu0 0.0
  %854 = vmatpush1.msra.mxu0 0.0
  %855 = vmatprep.subr.mxu0 0.0
  %856 = vmatpush1.msra.mxu0 0.0
  %857 = vmatprep.subr.mxu0 0.0
  %858 = vmatpush1.msra.mxu0 0.0
  %859 = vmatprep.subr.mxu0 0.0
  %860 = vmatpush1.msra.mxu0 0.0
  %861 = vmatprep.mubr.f32.mxu0 0.0
  %862 = vmatmul.mubr.f32.gmra.mrb[0].mxu0 %v795
  %v863 = vpop.f32.mrb[0].mxu0
  %v864 = vadd.f32 %v792, %v863
  %v865 = vpop.f32.mrb[0].mxu0
  %v866 = vadd.f32 %v792, %v865
  %867 = vdwg.mxu0
  %868 = vmatprep.subr.mxu0 %v674
  %869 = vmatpush1.msra.mxu0 %v673
  %870 = vmatprep.subr.mxu0 %v690
  %871 = vmatpush1.msra.mxu0 %v689
  %872 = vmatprep.subr.mxu0 %v706
  %873 = vmatpush1.msra.mxu0 %v705
  %874 = vmatprep.subr.mxu0 %v722
  %875 = vmatpush1.msra.mxu0 %v721
  %876 = vmatprep.subr.mxu0 %v656
  %877 = vmatpush1.msra.mxu0 %v655
  %878 = vmatprep.subr.mxu0 %v738
  %879 = vmatpush1.msra.mxu0 %v737
  %880 = vmatprep.subr.mxu0 %v754
  %881 = vmatpush1.msra.mxu0 %v753
  %882 = vmatprep.subr.mxu0 %v770
  %883 = vmatpush1.msra.mxu0 %v769
  %884 = vmatprep.subr.mxu0 %v786
  %885 = vmatpush1.msra.mxu0 %v785
  %886 = vmatprep.subr.mxu0 0.0
  %887 = vmatpush1.msra.mxu0 0.0
  %888 = vmatprep.subr.mxu0 0.0
  %889 = vmatpush1.msra.mxu0 0.0
  %890 = vmatprep.subr.mxu0 0.0
  %891 = vmatpush1.msra.mxu0 0.0
  %892 = vmatprep.subr.mxu0 0.0
  %893 = vmatpush1.msra.mxu0 0.0
  %894 = vmatprep.subr.mxu0 0.0
  %895 = vmatpush1.msra.mxu0 0.0
  %896 = vmatprep.subr.mxu0 0.0
  %897 = vmatpush1.msra.mxu0 0.0
  %898 = vmatprep.subr.mxu0 0.0
  %899 = vmatpush1.msra.mxu0 0.0
  %900 = vmatprep.subr.mxu0 0.0
  %901 = vmatpush1.msra.mxu0 0.0
  %902 = vmatprep.subr.mxu0 0.0
  %903 = vmatpush1.msra.mxu0 0.0
  %904 = vmatprep.subr.mxu0 0.0
  %905 = vmatpush1.msra.mxu0 0.0
  %906 = vmatprep.subr.mxu0 0.0
  %907 = vmatpush1.msra.mxu0 0.0
  %908 = vmatprep.subr.mxu0 0.0
  %909 = vmatpush1.msra.mxu0 0.0
  %910 = vmatprep.subr.mxu0 0.0
  %911 = vmatpush1.msra.mxu0 0.0
  %912 = vmatprep.subr.mxu0 0.0
  %913 = vmatpush1.msra.mxu0 0.0
  %914 = vmatprep.subr.mxu0 0.0
  %915 = vmatpush1.msra.mxu0 0.0
  %916 = vmatprep.subr.mxu0 0.0
  %917 = vmatpush1.msra.mxu0 0.0
  %918 = vmatprep.subr.mxu0 0.0
  %919 = vmatpush1.msra.mxu0 0.0
  %920 = vmatprep.subr.mxu0 0.0
  %921 = vmatpush1.msra.mxu0 0.0
  %922 = vmatprep.subr.mxu0 0.0
  %923 = vmatpush1.msra.mxu0 0.0
  %924 = vmatprep.subr.mxu0 0.0
  %925 = vmatpush1.msra.mxu0 0.0
  %926 = vmatprep.subr.mxu0 0.0
  %927 = vmatpush1.msra.mxu0 0.0
  %928 = vmatprep.subr.mxu0 0.0
  %929 = vmatpush1.msra.mxu0 0.0
  %930 = vmatprep.subr.mxu0 0.0
  %931 = vmatpush1.msra.mxu0 0.0
  %932 = vmatprep.mubr.f32.mxu0 0.0
  %933 = vmatmul.mubr.f32.gmra.mrb[0].mxu0 %v795
  %v934 = vpop.f32.mrb[0].mxu0
  %v935 = vadd.f32 %v792, %v934
  %v936 = vpop.f32.mrb[0].mxu0
  %v937 = vadd.f32 %v792, %v936
  %938 = vdwg.mxu0
  %vm939 = vcmp.ge.f32.partialorder %v864, 0.0
  %vm940 = vcmp.ge.f32.partialorder %v866, 0.0
  %vm941 = vcmp.ge.f32.partialorder %v935, 0.0
  %vm942 = vcmp.ge.f32.partialorder %v937, 0.0
  %v943 = vmul.f32 %v864, 0.05
  %v944 = vmul.f32 %v866, 0.05
  %v945 = vmul.f32 %v935, 0.05
  %v946 = vmul.f32 %v937, 0.05
  %v947 = vsel %vm939, %v864, %v943
  %v948 = vsel %vm940, %v866, %v944
  %v949 = vsel %vm941, %v935, %v945
  %v950 = vsel %vm942, %v937, %v946
  %s951 = scalar_lea.vmem %s1, 24
  %v952 = vld [vmem:[%s951] sm:$0xff]
  %953 = vrot.lane.b32.xlu0 %v947, 17
  %v954 = vpop.permute.xlu0 %953
  %955 = vrot.lane.b32.xlu0 %v948, 17
  %v956 = vpop.permute.xlu0 %955
  %957 = vrot.lane.b32.xlu0 %v949, 17
  %v958 = vpop.permute.xlu0 %957
  %959 = vrot.lane.b32.xlu0 %v950, 17
  %v960 = vpop.permute.xlu0 %959
  %v961 = vsel %vm32, %v958, %v960
  %v962 = vsel %vm32, %v956, %v958
  %v963 = vsel %vm32, %v954, %v956
  %v964 = vsel %vm32, %v960, %v954
  %v965 = vmul.f32 %v964, %v37
  %v966 = vmul.f32 %v963, %v38
  %v967 = vmul.f32 %v962, %v39
  %v968 = vmul.f32 %v961, %v40
  %969 = vrot.lane.b32.xlu0 %v947, 16
  %v970 = vpop.permute.xlu0 %969
  %971 = vrot.lane.b32.xlu0 %v948, 16
  %v972 = vpop.permute.xlu0 %971
  %973 = vrot.lane.b32.xlu0 %v949, 16
  %v974 = vpop.permute.xlu0 %973
  %975 = vrot.lane.b32.xlu0 %v950, 16
  %v976 = vpop.permute.xlu0 %975
  %v977 = vsel %vm53, %v974, %v976
  %v978 = vsel %vm53, %v972, %v974
  %v979 = vsel %vm53, %v970, %v972
  %v980 = vsel %vm53, %v976, %v970
  %v981 = vmul.f32 %v980, %v59
  %v982 = vmul.f32 %v979, %v60
  %v983 = vmul.f32 %v978, %v61
  %v984 = vmul.f32 %v977, %v62
  %985 = vrot.lane.b32.xlu0 %v947, 15
  %v986 = vpop.permute.xlu0 %985
  %987 = vrot.lane.b32.xlu0 %v948, 15
  %v988 = vpop.permute.xlu0 %987
  %989 = vrot.lane.b32.xlu0 %v949, 15
  %v990 = vpop.permute.xlu0 %989
  %991 = vrot.lane.b32.xlu0 %v950, 15
  %v992 = vpop.permute.xlu0 %991
  %v993 = vsel %vm75, %v990, %v992
  %v994 = vsel %vm75, %v988, %v990
  %v995 = vsel %vm75, %v986, %v988
  %v996 = vsel %vm75, %v992, %v986
  %v997 = vmul.f32 %v996, %v81
  %v998 = vmul.f32 %v995, %v82
  %v999 = vmul.f32 %v994, %v83
  %v1000 = vmul.f32 %v993, %v84
  %1001 = vrot.lane.b32.xlu0 %v947, 1
  %v1002 = vpop.permute.xlu0 %1001
  %1003 = vrot.lane.b32.xlu0 %v948, 1
  %v1004 = vpop.permute.xlu0 %1003
  %1005 = vrot.lane.b32.xlu0 %v949, 1
  %v1006 = vpop.permute.xlu0 %1005
  %1007 = vrot.lane.b32.xlu0 %v950, 1
  %v1008 = vpop.permute.xlu0 %1007
  %v1009 = vsel %vm97, %v1006, %v1008
  %v1010 = vsel %vm97, %v1004, %v1006
  %v1011 = vsel %vm97, %v1002, %v1004
  %v1012 = vsel %vm97, %v1008, %v1002
  %v1013 = vmul.f32 %v1012, %v103
  %v1014 = vmul.f32 %v1011, %v104
  %v1015 = vmul.f32 %v1010, %v105
  %v1016 = vmul.f32 %v1009, %v106
  %1017 = vrot.lane.b32.xlu0 %v947, 127
  %v1018 = vpop.permute.xlu0 %1017
  %1019 = vrot.lane.b32.xlu0 %v948, 127
  %v1020 = vpop.permute.xlu0 %1019
  %1021 = vrot.lane.b32.xlu0 %v949, 127
  %v1022 = vpop.permute.xlu0 %1021
  %1023 = vrot.lane.b32.xlu0 %v950, 127
  %v1024 = vpop.permute.xlu0 %1023
  %v1025 = vsel %vm119, %v1022, %v1024
  %v1026 = vsel %vm119, %v1020, %v1022
  %v1027 = vsel %vm119, %v1018, %v1020
  %v1028 = vsel %vm119, %v1024, %v1018
  %v1029 = vmul.f32 %v1027, %v125
  %v1030 = vmul.f32 %v1026, %v126
  %v1031 = vmul.f32 %v1025, %v127
  %v1032 = vmul.f32 %v1028, %v128
  %1033 = vrot.lane.b32.xlu0 %v947, 113
  %v1034 = vpop.permute.xlu0 %1033
  %1035 = vrot.lane.b32.xlu0 %v948, 113
  %v1036 = vpop.permute.xlu0 %1035
  %1037 = vrot.lane.b32.xlu0 %v949, 113
  %v1038 = vpop.permute.xlu0 %1037
  %1039 = vrot.lane.b32.xlu0 %v950, 113
  %v1040 = vpop.permute.xlu0 %1039
  %v1041 = vsel %vm141, %v1038, %v1040
  %v1042 = vsel %vm141, %v1036, %v1038
  %v1043 = vsel %vm141, %v1034, %v1036
  %v1044 = vsel %vm141, %v1040, %v1034
  %v1045 = vmul.f32 %v1043, %v147
  %v1046 = vmul.f32 %v1042, %v148
  %v1047 = vmul.f32 %v1041, %v149
  %v1048 = vmul.f32 %v1044, %v150
  %1049 = vrot.lane.b32.xlu0 %v947, 112
  %v1050 = vpop.permute.xlu0 %1049
  %1051 = vrot.lane.b32.xlu0 %v948, 112
  %v1052 = vpop.permute.xlu0 %1051
  %1053 = vrot.lane.b32.xlu0 %v949, 112
  %v1054 = vpop.permute.xlu0 %1053
  %1055 = vrot.lane.b32.xlu0 %v950, 112
  %v1056 = vpop.permute.xlu0 %1055
  %v1057 = vsel %vm163, %v1054, %v1056
  %v1058 = vsel %vm163, %v1052, %v1054
  %v1059 = vsel %vm163, %v1050, %v1052
  %v1060 = vsel %vm163, %v1056, %v1050
  %v1061 = vmul.f32 %v1059, %v169
  %v1062 = vmul.f32 %v1058, %v170
  %v1063 = vmul.f32 %v1057, %v171
  %v1064 = vmul.f32 %v1060, %v172
  %1065 = vrot.lane.b32.xlu0 %v947, 111
  %v1066 = vpop.permute.xlu0 %1065
  %1067 = vrot.lane.b32.xlu0 %v948, 111
  %v1068 = vpop.permute.xlu0 %1067
  %1069 = vrot.lane.b32.xlu0 %v949, 111
  %v1070 = vpop.permute.xlu0 %1069
  %1071 = vrot.lane.b32.xlu0 %v950, 111
  %v1072 = vpop.permute.xlu0 %1071
  %v1073 = vsel %vm185, %v1070, %v1072
  %v1074 = vsel %vm185, %v1068, %v1070
  %v1075 = vsel %vm185, %v1066, %v1068
  %v1076 = vsel %vm185, %v1072, %v1066
  %v1077 = vmul.f32 %v1075, %v191
  %v1078 = vmul.f32 %v1074, %v192
  %v1079 = vmul.f32 %v1073, %v193
  %v1080 = vmul.f32 %v1076, %v194
  %s1081 = scalar_lea.vmem %s2, 24
  %v1082 = vld [vmem:[%s1081] sm:$0xff]
  %1084 = vset.pattern.permute.xlu0 0
  %1085 = vperm.xlu0 %1084, %v1082
  %v1086 = vpop.permute.xlu0 %1085
  %v1089 = vsel %vm205, %v952, 0
  %1091 = vmatprep.subr.mxu0 %v966
  %1092 = vmatpush1.msra.mxu0 %v965
  %1093 = vmatprep.subr.mxu0 %v982
  %1094 = vmatpush1.msra.mxu0 %v981
  %1095 = vmatprep.subr.mxu0 %v998
  %1096 = vmatpush1.msra.mxu0 %v997
  %1097 = vmatprep.subr.mxu0 %v1014
  %1098 = vmatpush1.msra.mxu0 %v1013
  %1099 = vmatprep.subr.mxu0 %v948
  %1100 = vmatpush1.msra.mxu0 %v947
  %1101 = vmatprep.subr.mxu0 %v1030
  %1102 = vmatpush1.msra.mxu0 %v1029
  %1103 = vmatprep.subr.mxu0 %v1046
  %1104 = vmatpush1.msra.mxu0 %v1045
  %1105 = vmatprep.subr.mxu0 %v1062
  %1106 = vmatpush1.msra.mxu0 %v1061
  %1107 = vmatprep.subr.mxu0 %v1078
  %1108 = vmatpush1.msra.mxu0 %v1077
  %1109 = vmatprep.subr.mxu0 0.0
  %1110 = vmatpush1.msra.mxu0 0.0
  %1111 = vmatprep.subr.mxu0 0.0
  %1112 = vmatpush1.msra.mxu0 0.0
  %1113 = vmatprep.subr.mxu0 0.0
  %1114 = vmatpush1.msra.mxu0 0.0
  %1115 = vmatprep.subr.mxu0 0.0
  %1116 = vmatpush1.msra.mxu0 0.0
  %1117 = vmatprep.subr.mxu0 0.0
  %1118 = vmatpush1.msra.mxu0 0.0
  %1119 = vmatprep.subr.mxu0 0.0
  %1120 = vmatpush1.msra.mxu0 0.0
  %1121 = vmatprep.subr.mxu0 0.0
  %1122 = vmatpush1.msra.mxu0 0.0
  %1123 = vmatprep.subr.mxu0 0.0
  %1124 = vmatpush1.msra.mxu0 0.0
  %1125 = vmatprep.subr.mxu0 0.0
  %1126 = vmatpush1.msra.mxu0 0.0
  %1127 = vmatprep.subr.mxu0 0.0
  %1128 = vmatpush1.msra.mxu0 0.0
  %1129 = vmatprep.subr.mxu0 0.0
  %1130 = vmatpush1.msra.mxu0 0.0
  %1131 = vmatprep.subr.mxu0 0.0
  %1132 = vmatpush1.msra.mxu0 0.0
  %1133 = vmatprep.subr.mxu0 0.0
  %1134 = vmatpush1.msra.mxu0 0.0
  %1135 = vmatprep.subr.mxu0 0.0
  %1136 = vmatpush1.msra.mxu0 0.0
  %1137 = vmatprep.subr.mxu0 0.0
  %1138 = vmatpush1.msra.mxu0 0.0
  %1139 = vmatprep.subr.mxu0 0.0
  %1140 = vmatpush1.msra.mxu0 0.0
  %1141 = vmatprep.subr.mxu0 0.0
  %1142 = vmatpush1.msra.mxu0 0.0
  %1143 = vmatprep.subr.mxu0 0.0
  %1144 = vmatpush1.msra.mxu0 0.0
  %1145 = vmatprep.subr.mxu0 0.0
  %1146 = vmatpush1.msra.mxu0 0.0
  %1147 = vmatprep.subr.mxu0 0.0
  %1148 = vmatpush1.msra.mxu0 0.0
  %1149 = vmatprep.subr.mxu0 0.0
  %1150 = vmatpush1.msra.mxu0 0.0
  %1151 = vmatprep.subr.mxu0 0.0
  %1152 = vmatpush1.msra.mxu0 0.0
  %1153 = vmatprep.subr.mxu0 0.0
  %1154 = vmatpush1.msra.mxu0 0.0
  %1155 = vmatprep.mubr.f32.mxu0 0.0
  %1156 = vmatmul.mubr.f32.gmra.mrb[0].mxu0 %v1089
  %v1157 = vpop.f32.mrb[0].mxu0
  %v1158 = vadd.f32 %v1086, %v1157
  %v1159 = vpop.f32.mrb[0].mxu0
  %v1160 = vadd.f32 %v1086, %v1159
  %1161 = vdwg.mxu0
  %1162 = vmatprep.subr.mxu0 %v968
  %1163 = vmatpush1.msra.mxu0 %v967
  %1164 = vmatprep.subr.mxu0 %v984
  %1165 = vmatpush1.msra.mxu0 %v983
  %1166 = vmatprep.subr.mxu0 %v1000
  %1167 = vmatpush1.msra.mxu0 %v999
  %1168 = vmatprep.subr.mxu0 %v1016
  %1169 = vmatpush1.msra.mxu0 %v1015
  %1170 = vmatprep.subr.mxu0 %v950
  %1171 = vmatpush1.msra.mxu0 %v949
  %1172 = vmatprep.subr.mxu0 %v1032
  %1173 = vmatpush1.msra.mxu0 %v1031
  %1174 = vmatprep.subr.mxu0 %v1048
  %1175 = vmatpush1.msra.mxu0 %v1047
  %1176 = vmatprep.subr.mxu0 %v1064
  %1177 = vmatpush1.msra.mxu0 %v1063
  %1178 = vmatprep.subr.mxu0 %v1080
  %1179 = vmatpush1.msra.mxu0 %v1079
  %1180 = vmatprep.subr.mxu0 0.0
  %1181 = vmatpush1.msra.mxu0 0.0
  %1182 = vmatprep.subr.mxu0 0.0
  %1183 = vmatpush1.msra.mxu0 0.0
  %1184 = vmatprep.subr.mxu0 0.0
  %1185 = vmatpush1.msra.mxu0 0.0
  %1186 = vmatprep.subr.mxu0 0.0
  %1187 = vmatpush1.msra.mxu0 0.0
  %1188 = vmatprep.subr.mxu0 0.0
  %1189 = vmatpush1.msra.mxu0 0.0
  %1190 = vmatprep.subr.mxu0 0.0
  %1191 = vmatpush1.msra.mxu0 0.0
  %1192 = vmatprep.subr.mxu0 0.0
  %1193 = vmatpush1.msra.mxu0 0.0
  %1194 = vmatprep.subr.mxu0 0.0
  %1195 = vmatpush1.msra.mxu0 0.0
  %1196 = vmatprep.subr.mxu0 0.0
  %1197 = vmatpush1.msra.mxu0 0.0
  %1198 = vmatprep.subr.mxu0 0.0
  %1199 = vmatpush1.msra.mxu0 0.0
  %1200 = vmatprep.subr.mxu0 0.0
  %1201 = vmatpush1.msra.mxu0 0.0
  %1202 = vmatprep.subr.mxu0 0.0
  %1203 = vmatpush1.msra.mxu0 0.0
  %1204 = vmatprep.subr.mxu0 0.0
  %1205 = vmatpush1.msra.mxu0 0.0
  %1206 = vmatprep.subr.mxu0 0.0
  %1207 = vmatpush1.msra.mxu0 0.0
  %1208 = vmatprep.subr.mxu0 0.0
  %1209 = vmatpush1.msra.mxu0 0.0
  %1210 = vmatprep.subr.mxu0 0.0
  %1211 = vmatpush1.msra.mxu0 0.0
  %1212 = vmatprep.subr.mxu0 0.0
  %1213 = vmatpush1.msra.mxu0 0.0
  %1214 = vmatprep.subr.mxu0 0.0
  %1215 = vmatpush1.msra.mxu0 0.0
  %1216 = vmatprep.subr.mxu0 0.0
  %1217 = vmatpush1.msra.mxu0 0.0
  %1218 = vmatprep.subr.mxu0 0.0
  %1219 = vmatpush1.msra.mxu0 0.0
  %1220 = vmatprep.subr.mxu0 0.0
  %1221 = vmatpush1.msra.mxu0 0.0
  %1222 = vmatprep.subr.mxu0 0.0
  %1223 = vmatpush1.msra.mxu0 0.0
  %1224 = vmatprep.subr.mxu0 0.0
  %1225 = vmatpush1.msra.mxu0 0.0
  %1226 = vmatprep.mubr.f32.mxu0 0.0
  %1227 = vmatmul.mubr.f32.gmra.mrb[0].mxu0 %v1089
  %v1228 = vpop.f32.mrb[0].mxu0
  %v1229 = vadd.f32 %v1086, %v1228
  %v1230 = vpop.f32.mrb[0].mxu0
  %v1231 = vadd.f32 %v1086, %v1230
  %1232 = vdwg.mxu0
  %v1237 = vrot.slane %v653, 6
  %v1238 = vrot.slane %v654, 6
  %v1239 = vrot.slane %v655, 6
  %v1240 = vrot.slane %v656, 6
  %v1249 = vrot.slane %v947, 4
  %v1250 = vrot.slane %v948, 4
  %v1251 = vrot.slane %v949, 4
  %v1252 = vrot.slane %v950, 4
  %v1261 = vrot.slane %v1158, 2
  %v1262 = vrot.slane %v1160, 2
  %v1263 = vrot.slane %v1229, 2
  %v1264 = vrot.slane %v1231, 2
  %vm1269 = vcmask 1041408
  %v1270 = vsel %vm1269, %v359, %v1237
  %v1271 = vsel %vm1269, %v360, %v1238
  %v1272 = vsel %vm1269, %v361, %v1239
  %v1273 = vsel %vm1269, %v362, %v1240
  %vm1274 = vcmask 1043456
  %v1275 = vsel %vm1274, %v1270, %v1249
  %v1276 = vsel %vm1274, %v1271, %v1250
  %v1277 = vsel %vm1274, %v1272, %v1251
  %v1278 = vsel %vm1274, %v1273, %v1252
  %vm1279 = vcmask 1045504
  %v1280 = vsel %vm1279, %v1275, %v1261
  %v1281 = vsel %vm1279, %v1276, %v1262
  %v1282 = vsel %vm1279, %v1277, %v1263
  %v1283 = vsel %vm1279, %v1278, %v1264
  %1284 = vst [vmem:[%s4] sm:$0xff] %v1280
  %1285 = vst [vmem:[%s4 + $0x8] sm:$0xff] %v1281
  %1286 = vst [vmem:[%s4 + $0x10] sm:$0xff] %v1282
  %1287 = vst [vmem:[%s4 + $0x18] sm:$0xff] %v1283
  // Predicated region
  $region18: #{distillation_forward.1} parent=0 // pred_check
    _
  $region19: #{distillation_forward.1} parent=0 // pred_check_branch
    %1289 = sbr.rel (0) target = $region21
  $region20: #{distillation_forward.1} parent=0 // pred_region
    _
  $region21: #{distillation_forward.1} parent=0 // pred_fallthru
    _
  // Predicated region
  $region22: #{distillation_forward.1} parent=0 // pred_check
    _
  $region23: #{distillation_forward.1} parent=0 // pred_check_branch
    %1291 = sbr.rel (0) target = $region25
  $region24: #{distillation_forward.1} parent=0 // pred_region
    _
  $region25: #{distillation_forward.1} parent=0 // pred_fallthru
    _

</llo_original>
